<compile_context>
chip_gen: v7x
topology: tpu7x:2x2x1
jax: 0.10.0
libtpu: 0.0.40
codegen_flags: <defaults>
</compile_context>

<pallas_src>
import functools

import numpy as np
import jax
import jax.numpy as jnp
from jax import lax
from jax.experimental import pallas as pl
from jax.experimental.pallas import tpu as pltpu


# ---------------------------------------------------------------------------
# Fused kernel: conv1(GEMM)+ReLU -> conv2(tap GEMMs)+ReLU -> fc.
# One batch *tile* per grid step; every intermediate stays on-chip.
# Row order of the input tile (and of h1): (conv2_tap, conv2_position, batch).
# ---------------------------------------------------------------------------
def _fused_qnet_kernel(p1_ref, w1_ref, b1_ref, w2_ref, b2_ref, fcw_ref,
                       fcb_ref, o_ref, *, n_taps, n_pos2, bt, oc1, oc2):
    # conv1: one (n_taps*n_pos2*bt, K1) x (K1, oc1) dot; bf16 MXU, f32 acc.
    h1 = jnp.dot(p1_ref[...], w1_ref[...], preferred_element_type=jnp.float32)
    h1 = jnp.maximum(h1 + b1_ref[...], 0.0)
    h1 = h1.astype(jnp.bfloat16)                 # single full-width cast

    # conv2: sum over the k2*k2 taps.  Tap t consumes the contiguous rows
    # [t*n_pos2*bt, (t+1)*n_pos2*bt) of h1 and rows [t*oc1, (t+1)*oc1) of the
    # (tap, in_channel)-ordered weights.  All slices static -> plain 2-D dots.
    rows2 = n_pos2 * bt
    h2 = jnp.zeros((rows2, oc2), jnp.float32)
    for t in range(n_taps):
        h2 = h2 + jnp.dot(h1[t * rows2:(t + 1) * rows2, :],
                          w2_ref[t * oc1:(t + 1) * oc1, :],
                          preferred_element_type=jnp.float32)
    h2 = jnp.maximum(h2 + b2_ref[...], 0.0)      # (n_pos2*bt, oc2) f32

    # fc (kept in f32): q[b] = fcb + sum_p h2[p-block b-row] @ fcw[p-block].
    # h2 rows are (position, batch)-ordered, fc weights (position, channel)-
    # ordered, so each position is one contiguous (bt, oc2) x (oc2, A) dot.
    q = jnp.zeros((bt, fcb_ref.shape[-1]), jnp.float32)
    for p in range(n_pos2):
        q = q + jnp.dot(h2[p * bt:(p + 1) * bt, :],
                        fcw_ref[p * oc2:(p + 1) * oc2, :],
                        preferred_element_type=jnp.float32)
    o_ref[...] = q + fcb_ref[...]


# ---------------------------------------------------------------------------
# One-time parameter / index layout prep (hoisted out of the forward pass).
# ---------------------------------------------------------------------------
def prepare_params(params, H, W):
    w1, b1 = params["w1"], params["b1"]            # (oc1, Cin, 8, 8), (oc1,)
    w2, b2 = params["w2"], params["b2"]            # (oc2, oc1, 4, 4), (oc2,)
    fc_w, fc_b = params["fc_w"], params["fc_b"]    # (A, oc2*n_pos2), (A,)
    oc1, oc2, A = w1.shape[0], w2.shape[0], fc_w.shape[0]
    in_ch = w1.shape[1]
    k1, s1, k2, s2 = 8, 4, 4, 2
    # After torch's state.transpose(1, 3), NCHW spatial dims are (W, H):
    # conv dim-2 runs over original W, conv dim-3 over original H.
    OP1, OQ1 = (W - k1) // s1 + 1, (H - k1) // s1 + 1
    OP2, OQ2 = (OP1 - k2) // s2 + 1, (OQ1 - k2) // s2 + 1
    n_taps, n_pos2 = k2 * k2, OP2 * OQ2
    K1 = in_ch * k1 * k1

    # conv1 weights as the (Cin*k1*k1, oc1) GEMM operand.
    w1_mat = w1.reshape(oc1, -1).T.astype(jnp.bfloat16)
    # conv2 weights with rows ordered (tap=(kp2,kq2), in_channel).
    w2_mat = jnp.transpose(w2, (2, 3, 1, 0)).reshape(n_taps * oc1, oc2)
    w2_mat = w2_mat.astype(jnp.bfloat16)
    # fc weights with rows ordered (spatial_position, out_channel); kept f32
    # so the fc stage runs in full precision.
    fcw = jnp.transpose(fc_w.reshape(A, oc2, n_pos2), (2, 1, 0))
    fcw = fcw.reshape(n_pos2 * oc2, A).astype(jnp.float32)

    # Flat gather index (shared across batch): for each (conv2_tap,
    # conv2_position) row and each (in_channel, kp1, kq1) column, the offset
    # into state[b].reshape(-1) that the conv1 im2col patch reads.  This
    # replaces transpose -> fancy-index im2col -> take with a single gather.
    kp2, kq2, p2, q2 = np.meshgrid(np.arange(k2), np.arange(k2),
                                   np.arange(OP2), np.arange(OQ2),
                                   indexing="ij")
    op1 = (p2 * s2 + kp2).reshape(-1)              # conv1 pos along W axis
    oq1 = (q2 * s2 + kq2).reshape(-1)              # conv1 pos along H axis
    c, kp1, kq1 = np.meshgrid(np.arange(in_ch), np.arange(k1), np.arange(k1),
                              indexing="ij")
    c, kp1, kq1 = c.reshape(-1), kp1.reshape(-1), kq1.reshape(-1)
    wc = op1[:, None] * s1 + kp1[None, :]          # original W coordinate
    hc = oq1[:, None] * s1 + kq1[None, :]          # original H coordinate
    flat_idx = (hc * (W * in_ch) + wc * in_ch + c[None, :]).astype(np.int32)

    return {
        "w1": w1_mat, "b1": b1.reshape(1, oc1).astype(jnp.float32),
        "w2": w2_mat, "b2": b2.reshape(1, oc2).astype(jnp.float32),
        "fcw": fcw, "fcb": fc_b.reshape(1, A).astype(jnp.float32),
        "flat_idx": jnp.asarray(flat_idx),         # (n_taps*n_pos2, K1)
        "geom": dict(n_taps=n_taps, n_pos2=n_pos2, oc1=oc1, oc2=oc2,
                     num_actions=A, K1=K1),
    }


@functools.partial(jax.jit, static_argnames=(
    "n_taps", "n_pos2", "oc1", "oc2", "num_actions", "K1"))
def _forward_impl(state, w1, b1, w2, b2, fcw, fcb, flat_idx, *, n_taps,
                  n_pos2, oc1, oc2, num_actions, K1):
    B = state.shape[0]
    TP = n_taps * n_pos2

    # Batch tile: whole batch in one step when small (single-TC friendly),
    # 64-element tiles otherwise (>=2 steps for v7x megacore, ~4 MiB of
    # double-buffered input per step -> safe under every scoped-VMEM default).
    bt = B if B <= 64 else 64
    G = -(-B // bt)
    Bp = G * bt

    # Single flat gather straight out of the raw state (bf16), then reorder
    # rows within each batch tile to (tap, position, batch).
    p1 = jnp.take(state.astype(jnp.bfloat16).reshape(B, -1),
                  flat_idx.reshape(-1), axis=1).reshape(B, TP, K1)
    if Bp != B:
        p1 = jnp.pad(p1, ((0, Bp - B), (0, 0), (0, 0)))
    p1 = p1.reshape(G, bt, TP, K1).transpose(0, 2, 1, 3)
    p1 = p1.reshape(G * TP * bt, K1)

    kernel = functools.partial(_fused_qnet_kernel, n_taps=n_taps,
                               n_pos2=n_pos2, bt=bt, oc1=oc1, oc2=oc2)
    out = pl.pallas_call(
        kernel,
        out_shape=jax.ShapeDtypeStruct((Bp, num_actions), jnp.float32),
        grid_spec=pltpu.PrefetchScalarGridSpec(
            num_scalar_prefetch=0,
            grid=(G,),
            in_specs=[
                pl.BlockSpec((TP * bt, K1), lambda g: (g, 0)),
                pl.BlockSpec((K1, oc1), lambda g: (0, 0)),
                pl.BlockSpec((1, oc1), lambda g: (0, 0)),
                pl.BlockSpec((n_taps * oc1, oc2), lambda g: (0, 0)),
                pl.BlockSpec((1, oc2), lambda g: (0, 0)),
                pl.BlockSpec((n_pos2 * oc2, num_actions), lambda g: (0, 0)),
                pl.BlockSpec((1, num_actions), lambda g: (0, 0)),
            ],
            out_specs=pl.BlockSpec((bt, num_actions), lambda g: (g, 0)),
        ),
        compiler_params=pltpu.CompilerParams(
            dimension_semantics=("parallel",)),
    )(p1, w1, b1, w2, b2, fcw, fcb)
    return out[:B]


def conv_qnet_forward(state, prep):
    """Pallas implementation of ConvQNet.forward. state: (B, H, W, C*history)."""
    return _forward_impl(state, prep["w1"], prep["b1"], prep["w2"], prep["b2"],
                         prep["fcw"], prep["fcb"], prep["flat_idx"],
                         **prep["geom"])


# ---------------------------------------------------------------------------
# Pure-XLA f32 reference matching the PyTorch module semantics.
# ---------------------------------------------------------------------------
def reference_forward(state, params):
    w1, b1 = params["w1"], params["b1"]
    w2, b2 = params["w2"], params["b2"]
    fc_w, fc_b = params["fc_w"], params["fc_b"]
    x = jnp.transpose(state, (0, 3, 2, 1))
    dn = ("NCHW", "OIHW", "NCHW")
    h = lax.conv_general_dilated(x, w1, (4, 4), "VALID", dimension_numbers=dn)
    h = jnp.maximum(h + b1[None, :, None, None], 0.0)
    h = lax.conv_general_dilated(h, w2, (2, 2), "VALID", dimension_numbers=dn)
    h = jnp.maximum(h + b2[None, :, None, None], 0.0)
    h = h.reshape(h.shape[0], -1)
    return h @ fc_w.T + fc_b


def init_params(key, in_ch, num_actions, H, W):
    h1 = (H - 8) // 4 + 1
    out = (h1 - 4) // 2 + 1
    ks = jax.random.split(key, 6)
    return {
        "w1": 0.05 * jax.random.normal(ks[0], (16, in_ch, 8, 8), jnp.float32),
        "b1": 0.01 * jax.random.normal(ks[1], (16,), jnp.float32),
        "w2": 0.05 * jax.random.normal(ks[2], (32, 16, 4, 4), jnp.float32),
        "b2": 0.01 * jax.random.normal(ks[3], (32,), jnp.float32),
        "fc_w": 0.05 * jax.random.normal(
            ks[4], (num_actions, out * out * 32), jnp.float32),
        "fc_b": 0.01 * jax.random.normal(ks[5], (num_actions,), jnp.float32),
    }


if __name__ == "__main__":
    # Module-consistent shapes: obs (H, W, C) = (28, 28, 1), state_history = 4
    # -> in channels 4; 6 actions; batch 2.
    B, H, W, C, history, num_actions = 2, 28, 28, 1, 4, 6
    in_ch = C * history

    key = jax.random.PRNGKey(0)
    k_state, k_params = jax.random.split(key)
    state = jax.random.normal(k_state, (B, H, W, in_ch), jnp.float32)
    params = init_params(k_params, in_ch, num_actions, H, W)
    prep = prepare_params(params, H, W)

    q = jax.block_until_ready(conv_qnet_forward(state, prep))
    q_ref = jax.block_until_ready(reference_forward(state, params))

    assert q.shape == (B, num_actions), q.shape
    # conv stages use bf16 MXU operands with f32 accumulation (fc stays f32)
    # -> relaxed tolerance vs the pure-f32 reference.
    if not jnp.allclose(q, q_ref, atol=5e-2, rtol=5e-2):
        raise AssertionError("Pallas ConvQNet output mismatch vs XLA reference")
    print("KERNEL_OK")
</pallas_src>

<mosaic_0001>
module attributes {stable_mosaic.version = 11 : i64} {
  func.func @_fused_qnet_kernel(%arg0: i32, %arg1: memref<128x256xbf16, #tpu.memory_space<vmem>>, %arg2: memref<256x16xbf16, #tpu.memory_space<vmem>>, %arg3: memref<1x16xf32, #tpu.memory_space<vmem>>, %arg4: memref<256x32xbf16, #tpu.memory_space<vmem>>, %arg5: memref<1x32xf32, #tpu.memory_space<vmem>>, %arg6: memref<128x6xf32, #tpu.memory_space<vmem>>, %arg7: memref<1x6xf32, #tpu.memory_space<vmem>>, %arg8: memref<2x6xf32, #tpu.memory_space<vmem>>) attributes {dimension_semantics = [#tpu.dimension_semantics<parallel>], iteration_bounds = array<i64: 1>, scalar_prefetch = 0 : i64, scratch_operands = 0 : i64, tpu.core_type = #tpu.core_type<tc>, window_params = [{transform_indices = @transform_0, window_bounds = array<i64: 128, 256>}, {pipeline_mode = #tpu.pipeline_mode<synchronous>, transform_indices = @transform_1, window_bounds = array<i64: 256, 16>}, {pipeline_mode = #tpu.pipeline_mode<synchronous>, transform_indices = @transform_2, window_bounds = array<i64: 1, 16>}, {pipeline_mode = #tpu.pipeline_mode<synchronous>, transform_indices = @transform_3, window_bounds = array<i64: 256, 32>}, {pipeline_mode = #tpu.pipeline_mode<synchronous>, transform_indices = @transform_4, window_bounds = array<i64: 1, 32>}, {pipeline_mode = #tpu.pipeline_mode<synchronous>, transform_indices = @transform_5, window_bounds = array<i64: 128, 6>}, {pipeline_mode = #tpu.pipeline_mode<synchronous>, transform_indices = @transform_6, window_bounds = array<i64: 1, 6>}, {transform_indices = @transform_7, window_bounds = array<i64: 2, 6>}]} {
    %c0 = arith.constant 0 : index
    %c0_0 = arith.constant 0 : index
    %0 = vector.load %arg1[%c0, %c0_0] : memref<128x256xbf16, #tpu.memory_space<vmem>>, vector<128x256xbf16>
    %c0_1 = arith.constant 0 : index
    %c0_2 = arith.constant 0 : index
    %1 = vector.load %arg2[%c0_1, %c0_2] : memref<256x16xbf16, #tpu.memory_space<vmem>>, vector<256x16xbf16>
    %cst = arith.constant dense<0.000000e+00> : vector<128x16xf32>
    %2 = tpu.matmul %0, %1, %cst {dimension_numbers = #tpu.dot_dimension_numbers<[1], [0], [0], [1], [0, 0, 1, 1], [], []>} : vector<128x256xbf16>, vector<256x16xbf16>, vector<128x16xf32> -> vector<128x16xf32>
    %c0_3 = arith.constant 0 : index
    %c0_4 = arith.constant 0 : index
    %3 = vector.load %arg3[%c0_3, %c0_4] : memref<1x16xf32, #tpu.memory_space<vmem>>, vector<1x16xf32>
    %4 = vector.broadcast %3 : vector<1x16xf32> to vector<128x16xf32>
    %5 = arith.addf %2, %4 : vector<128x16xf32>
    %cst_5 = arith.constant 0.000000e+00 : f32
    %6 = vector.broadcast %cst_5 : f32 to vector<128x16xf32>
    %7 = arith.maximumf %5, %6 : vector<128x16xf32>
    %8 = arith.truncf %7 : vector<128x16xf32> to vector<128x16xbf16>
    %cst_6 = arith.constant 0.000000e+00 : f32
    %9 = vector.broadcast %cst_6 : f32 to vector<8x32xf32>
    %10 = vector.extract_strided_slice %8 {offsets = [0, 0], sizes = [8, 16], strides = [1, 1]} : vector<128x16xbf16> to vector<8x16xbf16>
    %c0_7 = arith.constant 0 : index
    %c0_8 = arith.constant 0 : index
    %11 = vector.load %arg4[%c0_7, %c0_8] : memref<256x32xbf16, #tpu.memory_space<vmem>>, vector<16x32xbf16>
    %cst_9 = arith.constant dense<0.000000e+00> : vector<8x32xf32>
    %12 = tpu.matmul %10, %11, %cst_9 {dimension_numbers = #tpu.dot_dimension_numbers<[1], [0], [0], [1], [0, 0, 1, 1], [], []>} : vector<8x16xbf16>, vector<16x32xbf16>, vector<8x32xf32> -> vector<8x32xf32>
    %13 = arith.addf %9, %12 : vector<8x32xf32>
    %14 = vector.extract_strided_slice %8 {offsets = [8, 0], sizes = [8, 16], strides = [1, 1]} : vector<128x16xbf16> to vector<8x16xbf16>
    %c16 = arith.constant 16 : index
    %c0_10 = arith.constant 0 : index
    %15 = vector.load %arg4[%c16, %c0_10] : memref<256x32xbf16, #tpu.memory_space<vmem>>, vector<16x32xbf16>
    %cst_11 = arith.constant dense<0.000000e+00> : vector<8x32xf32>
    %16 = tpu.matmul %14, %15, %cst_11 {dimension_numbers = #tpu.dot_dimension_numbers<[1], [0], [0], [1], [0, 0, 1, 1], [], []>} : vector<8x16xbf16>, vector<16x32xbf16>, vector<8x32xf32> -> vector<8x32xf32>
    %17 = arith.addf %13, %16 : vector<8x32xf32>
    %18 = vector.extract_strided_slice %8 {offsets = [16, 0], sizes = [8, 16], strides = [1, 1]} : vector<128x16xbf16> to vector<8x16xbf16>
    %c32 = arith.constant 32 : index
    %c0_12 = arith.constant 0 : index
    %19 = vector.load %arg4[%c32, %c0_12] : memref<256x32xbf16, #tpu.memory_space<vmem>>, vector<16x32xbf16>
    %cst_13 = arith.constant dense<0.000000e+00> : vector<8x32xf32>
    %20 = tpu.matmul %18, %19, %cst_13 {dimension_numbers = #tpu.dot_dimension_numbers<[1], [0], [0], [1], [0, 0, 1, 1], [], []>} : vector<8x16xbf16>, vector<16x32xbf16>, vector<8x32xf32> -> vector<8x32xf32>
    %21 = arith.addf %17, %20 : vector<8x32xf32>
    %22 = vector.extract_strided_slice %8 {offsets = [24, 0], sizes = [8, 16], strides = [1, 1]} : vector<128x16xbf16> to vector<8x16xbf16>
    %c48 = arith.constant 48 : index
    %c0_14 = arith.constant 0 : index
    %23 = vector.load %arg4[%c48, %c0_14] : memref<256x32xbf16, #tpu.memory_space<vmem>>, vector<16x32xbf16>
    %cst_15 = arith.constant dense<0.000000e+00> : vector<8x32xf32>
    %24 = tpu.matmul %22, %23, %cst_15 {dimension_numbers = #tpu.dot_dimension_numbers<[1], [0], [0], [1], [0, 0, 1, 1], [], []>} : vector<8x16xbf16>, vector<16x32xbf16>, vector<8x32xf32> -> vector<8x32xf32>
    %25 = arith.addf %21, %24 : vector<8x32xf32>
    %26 = vector.extract_strided_slice %8 {offsets = [32, 0], sizes = [8, 16], strides = [1, 1]} : vector<128x16xbf16> to vector<8x16xbf16>
    %c64 = arith.constant 64 : index
    %c0_16 = arith.constant 0 : index
    %27 = vector.load %arg4[%c64, %c0_16] : memref<256x32xbf16, #tpu.memory_space<vmem>>, vector<16x32xbf16>
    %cst_17 = arith.constant dense<0.000000e+00> : vector<8x32xf32>
    %28 = tpu.matmul %26, %27, %cst_17 {dimension_numbers = #tpu.dot_dimension_numbers<[1], [0], [0], [1], [0, 0, 1, 1], [], []>} : vector<8x16xbf16>, vector<16x32xbf16>, vector<8x32xf32> -> vector<8x32xf32>
    %29 = arith.addf %25, %28 : vector<8x32xf32>
    %30 = vector.extract_strided_slice %8 {offsets = [40, 0], sizes = [8, 16], strides = [1, 1]} : vector<128x16xbf16> to vector<8x16xbf16>
    %c80 = arith.constant 80 : index
    %c0_18 = arith.constant 0 : index
    %31 = vector.load %arg4[%c80, %c0_18] : memref<256x32xbf16, #tpu.memory_space<vmem>>, vector<16x32xbf16>
    %cst_19 = arith.constant dense<0.000000e+00> : vector<8x32xf32>
    %32 = tpu.matmul %30, %31, %cst_19 {dimension_numbers = #tpu.dot_dimension_numbers<[1], [0], [0], [1], [0, 0, 1, 1], [], []>} : vector<8x16xbf16>, vector<16x32xbf16>, vector<8x32xf32> -> vector<8x32xf32>
    %33 = arith.addf %29, %32 : vector<8x32xf32>
    %34 = vector.extract_strided_slice %8 {offsets = [48, 0], sizes = [8, 16], strides = [1, 1]} : vector<128x16xbf16> to vector<8x16xbf16>
    %c96 = arith.constant 96 : index
    %c0_20 = arith.constant 0 : index
    %35 = vector.load %arg4[%c96, %c0_20] : memref<256x32xbf16, #tpu.memory_space<vmem>>, vector<16x32xbf16>
    %cst_21 = arith.constant dense<0.000000e+00> : vector<8x32xf32>
    %36 = tpu.matmul %34, %35, %cst_21 {dimension_numbers = #tpu.dot_dimension_numbers<[1], [0], [0], [1], [0, 0, 1, 1], [], []>} : vector<8x16xbf16>, vector<16x32xbf16>, vector<8x32xf32> -> vector<8x32xf32>
    %37 = arith.addf %33, %36 : vector<8x32xf32>
    %38 = vector.extract_strided_slice %8 {offsets = [56, 0], sizes = [8, 16], strides = [1, 1]} : vector<128x16xbf16> to vector<8x16xbf16>
    %c112 = arith.constant 112 : index
    %c0_22 = arith.constant 0 : index
    %39 = vector.load %arg4[%c112, %c0_22] : memref<256x32xbf16, #tpu.memory_space<vmem>>, vector<16x32xbf16>
    %cst_23 = arith.constant dense<0.000000e+00> : vector<8x32xf32>
    %40 = tpu.matmul %38, %39, %cst_23 {dimension_numbers = #tpu.dot_dimension_numbers<[1], [0], [0], [1], [0, 0, 1, 1], [], []>} : vector<8x16xbf16>, vector<16x32xbf16>, vector<8x32xf32> -> vector<8x32xf32>
    %41 = arith.addf %37, %40 : vector<8x32xf32>
    %42 = vector.extract_strided_slice %8 {offsets = [64, 0], sizes = [8, 16], strides = [1, 1]} : vector<128x16xbf16> to vector<8x16xbf16>
    %c128 = arith.constant 128 : index
    %c0_24 = arith.constant 0 : index
    %43 = vector.load %arg4[%c128, %c0_24] : memref<256x32xbf16, #tpu.memory_space<vmem>>, vector<16x32xbf16>
    %cst_25 = arith.constant dense<0.000000e+00> : vector<8x32xf32>
    %44 = tpu.matmul %42, %43, %cst_25 {dimension_numbers = #tpu.dot_dimension_numbers<[1], [0], [0], [1], [0, 0, 1, 1], [], []>} : vector<8x16xbf16>, vector<16x32xbf16>, vector<8x32xf32> -> vector<8x32xf32>
    %45 = arith.addf %41, %44 : vector<8x32xf32>
    %46 = vector.extract_strided_slice %8 {offsets = [72, 0], sizes = [8, 16], strides = [1, 1]} : vector<128x16xbf16> to vector<8x16xbf16>
    %c144 = arith.constant 144 : index
    %c0_26 = arith.constant 0 : index
    %47 = vector.load %arg4[%c144, %c0_26] : memref<256x32xbf16, #tpu.memory_space<vmem>>, vector<16x32xbf16>
    %cst_27 = arith.constant dense<0.000000e+00> : vector<8x32xf32>
    %48 = tpu.matmul %46, %47, %cst_27 {dimension_numbers = #tpu.dot_dimension_numbers<[1], [0], [0], [1], [0, 0, 1, 1], [], []>} : vector<8x16xbf16>, vector<16x32xbf16>, vector<8x32xf32> -> vector<8x32xf32>
    %49 = arith.addf %45, %48 : vector<8x32xf32>
    %50 = vector.extract_strided_slice %8 {offsets = [80, 0], sizes = [8, 16], strides = [1, 1]} : vector<128x16xbf16> to vector<8x16xbf16>
    %c160 = arith.constant 160 : index
    %c0_28 = arith.constant 0 : index
    %51 = vector.load %arg4[%c160, %c0_28] : memref<256x32xbf16, #tpu.memory_space<vmem>>, vector<16x32xbf16>
    %cst_29 = arith.constant dense<0.000000e+00> : vector<8x32xf32>
    %52 = tpu.matmul %50, %51, %cst_29 {dimension_numbers = #tpu.dot_dimension_numbers<[1], [0], [0], [1], [0, 0, 1, 1], [], []>} : vector<8x16xbf16>, vector<16x32xbf16>, vector<8x32xf32> -> vector<8x32xf32>
    %53 = arith.addf %49, %52 : vector<8x32xf32>
    %54 = vector.extract_strided_slice %8 {offsets = [88, 0], sizes = [8, 16], strides = [1, 1]} : vector<128x16xbf16> to vector<8x16xbf16>
    %c176 = arith.constant 176 : index
    %c0_30 = arith.constant 0 : index
    %55 = vector.load %arg4[%c176, %c0_30] : memref<256x32xbf16, #tpu.memory_space<vmem>>, vector<16x32xbf16>
    %cst_31 = arith.constant dense<0.000000e+00> : vector<8x32xf32>
    %56 = tpu.matmul %54, %55, %cst_31 {dimension_numbers = #tpu.dot_dimension_numbers<[1], [0], [0], [1], [0, 0, 1, 1], [], []>} : vector<8x16xbf16>, vector<16x32xbf16>, vector<8x32xf32> -> vector<8x32xf32>
    %57 = arith.addf %53, %56 : vector<8x32xf32>
    %58 = vector.extract_strided_slice %8 {offsets = [96, 0], sizes = [8, 16], strides = [1, 1]} : vector<128x16xbf16> to vector<8x16xbf16>
    %c192 = arith.constant 192 : index
    %c0_32 = arith.constant 0 : index
    %59 = vector.load %arg4[%c192, %c0_32] : memref<256x32xbf16, #tpu.memory_space<vmem>>, vector<16x32xbf16>
    %cst_33 = arith.constant dense<0.000000e+00> : vector<8x32xf32>
    %60 = tpu.matmul %58, %59, %cst_33 {dimension_numbers = #tpu.dot_dimension_numbers<[1], [0], [0], [1], [0, 0, 1, 1], [], []>} : vector<8x16xbf16>, vector<16x32xbf16>, vector<8x32xf32> -> vector<8x32xf32>
    %61 = arith.addf %57, %60 : vector<8x32xf32>
    %62 = vector.extract_strided_slice %8 {offsets = [104, 0], sizes = [8, 16], strides = [1, 1]} : vector<128x16xbf16> to vector<8x16xbf16>
    %c208 = arith.constant 208 : index
    %c0_34 = arith.constant 0 : index
    %63 = vector.load %arg4[%c208, %c0_34] : memref<256x32xbf16, #tpu.memory_space<vmem>>, vector<16x32xbf16>
    %cst_35 = arith.constant dense<0.000000e+00> : vector<8x32xf32>
    %64 = tpu.matmul %62, %63, %cst_35 {dimension_numbers = #tpu.dot_dimension_numbers<[1], [0], [0], [1], [0, 0, 1, 1], [], []>} : vector<8x16xbf16>, vector<16x32xbf16>, vector<8x32xf32> -> vector<8x32xf32>
    %65 = arith.addf %61, %64 : vector<8x32xf32>
    %66 = vector.extract_strided_slice %8 {offsets = [112, 0], sizes = [8, 16], strides = [1, 1]} : vector<128x16xbf16> to vector<8x16xbf16>
    %c224 = arith.constant 224 : index
    %c0_36 = arith.constant 0 : index
    %67 = vector.load %arg4[%c224, %c0_36] : memref<256x32xbf16, #tpu.memory_space<vmem>>, vector<16x32xbf16>
    %cst_37 = arith.constant dense<0.000000e+00> : vector<8x32xf32>
    %68 = tpu.matmul %66, %67, %cst_37 {dimension_numbers = #tpu.dot_dimension_numbers<[1], [0], [0], [1], [0, 0, 1, 1], [], []>} : vector<8x16xbf16>, vector<16x32xbf16>, vector<8x32xf32> -> vector<8x32xf32>
    %69 = arith.addf %65, %68 : vector<8x32xf32>
    %70 = vector.extract_strided_slice %8 {offsets = [120, 0], sizes = [8, 16], strides = [1, 1]} : vector<128x16xbf16> to vector<8x16xbf16>
    %c240 = arith.constant 240 : index
    %c0_38 = arith.constant 0 : index
    %71 = vector.load %arg4[%c240, %c0_38] : memref<256x32xbf16, #tpu.memory_space<vmem>>, vector<16x32xbf16>
    %cst_39 = arith.constant dense<0.000000e+00> : vector<8x32xf32>
    %72 = tpu.matmul %70, %71, %cst_39 {dimension_numbers = #tpu.dot_dimension_numbers<[1], [0], [0], [1], [0, 0, 1, 1], [], []>} : vector<8x16xbf16>, vector<16x32xbf16>, vector<8x32xf32> -> vector<8x32xf32>
    %73 = arith.addf %69, %72 : vector<8x32xf32>
    %c0_40 = arith.constant 0 : index
    %c0_41 = arith.constant 0 : index
    %74 = vector.load %arg5[%c0_40, %c0_41] : memref<1x32xf32, #tpu.memory_space<vmem>>, vector<1x32xf32>
    %75 = vector.broadcast %74 : vector<1x32xf32> to vector<8x32xf32>
    %76 = arith.addf %73, %75 : vector<8x32xf32>
    %cst_42 = arith.constant 0.000000e+00 : f32
    %77 = vector.broadcast %cst_42 : f32 to vector<8x32xf32>
    %78 = arith.maximumf %76, %77 : vector<8x32xf32>
    %cst_43 = arith.constant 0.000000e+00 : f32
    %79 = vector.broadcast %cst_43 : f32 to vector<2x6xf32>
    %80 = vector.extract_strided_slice %78 {offsets = [0, 0], sizes = [2, 32], strides = [1, 1]} : vector<8x32xf32> to vector<2x32xf32>
    %c0_44 = arith.constant 0 : index
    %c0_45 = arith.constant 0 : index
    %81 = vector.load %arg6[%c0_44, %c0_45] : memref<128x6xf32, #tpu.memory_space<vmem>>, vector<32x6xf32>
    %cst_46 = arith.constant dense<0.000000e+00> : vector<2x6xf32>
    %82 = tpu.matmul %80, %81, %cst_46 {dimension_numbers = #tpu.dot_dimension_numbers<[1], [0], [0], [1], [0, 0, 1, 1], [], []>} : vector<2x32xf32>, vector<32x6xf32>, vector<2x6xf32> -> vector<2x6xf32>
    %83 = arith.addf %79, %82 : vector<2x6xf32>
    %84 = vector.extract_strided_slice %78 {offsets = [2, 0], sizes = [2, 32], strides = [1, 1]} : vector<8x32xf32> to vector<2x32xf32>
    %c32_47 = arith.constant 32 : index
    %c0_48 = arith.constant 0 : index
    %85 = vector.load %arg6[%c32_47, %c0_48] : memref<128x6xf32, #tpu.memory_space<vmem>>, vector<32x6xf32>
    %cst_49 = arith.constant dense<0.000000e+00> : vector<2x6xf32>
    %86 = tpu.matmul %84, %85, %cst_49 {dimension_numbers = #tpu.dot_dimension_numbers<[1], [0], [0], [1], [0, 0, 1, 1], [], []>} : vector<2x32xf32>, vector<32x6xf32>, vector<2x6xf32> -> vector<2x6xf32>
    %87 = arith.addf %83, %86 : vector<2x6xf32>
    %88 = vector.extract_strided_slice %78 {offsets = [4, 0], sizes = [2, 32], strides = [1, 1]} : vector<8x32xf32> to vector<2x32xf32>
    %c64_50 = arith.constant 64 : index
    %c0_51 = arith.constant 0 : index
    %89 = vector.load %arg6[%c64_50, %c0_51] : memref<128x6xf32, #tpu.memory_space<vmem>>, vector<32x6xf32>
    %cst_52 = arith.constant dense<0.000000e+00> : vector<2x6xf32>
    %90 = tpu.matmul %88, %89, %cst_52 {dimension_numbers = #tpu.dot_dimension_numbers<[1], [0], [0], [1], [0, 0, 1, 1], [], []>} : vector<2x32xf32>, vector<32x6xf32>, vector<2x6xf32> -> vector<2x6xf32>
    %91 = arith.addf %87, %90 : vector<2x6xf32>
    %92 = vector.extract_strided_slice %78 {offsets = [6, 0], sizes = [2, 32], strides = [1, 1]} : vector<8x32xf32> to vector<2x32xf32>
    %c96_53 = arith.constant 96 : index
    %c0_54 = arith.constant 0 : index
    %93 = vector.load %arg6[%c96_53, %c0_54] : memref<128x6xf32, #tpu.memory_space<vmem>>, vector<32x6xf32>
    %cst_55 = arith.constant dense<0.000000e+00> : vector<2x6xf32>
    %94 = tpu.matmul %92, %93, %cst_55 {dimension_numbers = #tpu.dot_dimension_numbers<[1], [0], [0], [1], [0, 0, 1, 1], [], []>} : vector<2x32xf32>, vector<32x6xf32>, vector<2x6xf32> -> vector<2x6xf32>
    %95 = arith.addf %91, %94 : vector<2x6xf32>
    %c0_56 = arith.constant 0 : index
    %c0_57 = arith.constant 0 : index
    %96 = vector.load %arg7[%c0_56, %c0_57] : memref<1x6xf32, #tpu.memory_space<vmem>>, vector<1x6xf32>
    %97 = vector.broadcast %96 : vector<1x6xf32> to vector<2x6xf32>
    %98 = arith.addf %95, %97 : vector<2x6xf32>
    %c0_58 = arith.constant 0 : index
    %c0_59 = arith.constant 0 : index
    %99 = vector.load %arg8[%c0_58, %c0_59] : memref<2x6xf32, #tpu.memory_space<vmem>>, vector<2x6xf32>
    tpu.vector_store %arg8[%c0_58, %c0_59], %98 {strides = array<i32>} : memref<2x6xf32, #tpu.memory_space<vmem>>, vector<2x6xf32>,
    return
  }
  func.func @transform_0(%arg0: i32) -> (i32, i32) {
    %c0_i32 = arith.constant 0 : i32
    %c0_i32_0 = arith.constant 0 : i32
    return %arg0, %c0_i32 : i32, i32
  }
  func.func @transform_1(%arg0: i32) -> (i32, i32) {
    %c0_i32 = arith.constant 0 : i32
    %c0_i32_0 = arith.constant 0 : i32
    %c0_i32_1 = arith.constant 0 : i32
    return %c0_i32, %c0_i32_0 : i32, i32
  }
  func.func @transform_2(%arg0: i32) -> (i32, i32) {
    %c0_i32 = arith.constant 0 : i32
    %c0_i32_0 = arith.constant 0 : i32
    %c0_i32_1 = arith.constant 0 : i32
    return %c0_i32, %c0_i32_0 : i32, i32
  }
  func.func @transform_3(%arg0: i32) -> (i32, i32) {
    %c0_i32 = arith.constant 0 : i32
    %c0_i32_0 = arith.constant 0 : i32
    %c0_i32_1 = arith.constant 0 : i32
    return %c0_i32, %c0_i32_0 : i32, i32
  }
  func.func @transform_4(%arg0: i32) -> (i32, i32) {
    %c0_i32 = arith.constant 0 : i32
    %c0_i32_0 = arith.constant 0 : i32
    %c0_i32_1 = arith.constant 0 : i32
    return %c0_i32, %c0_i32_0 : i32, i32
  }
  func.func @transform_5(%arg0: i32) -> (i32, i32) {
    %c0_i32 = arith.constant 0 : i32
    %c0_i32_0 = arith.constant 0 : i32
    %c0_i32_1 = arith.constant 0 : i32
    return %c0_i32, %c0_i32_0 : i32, i32
  }
  func.func @transform_6(%arg0: i32) -> (i32, i32) {
    %c0_i32 = arith.constant 0 : i32
    %c0_i32_0 = arith.constant 0 : i32
    %c0_i32_1 = arith.constant 0 : i32
    return %c0_i32, %c0_i32_0 : i32, i32
  }
  func.func @transform_7(%arg0: i32) -> (i32, i32) {
    %c0_i32 = arith.constant 0 : i32
    %c0_i32_0 = arith.constant 0 : i32
    return %arg0, %c0_i32 : i32, i32
  }
}

</mosaic_0001>

<llo_original>
// kernel: _forward_impl.1
$region0: #{_forward_impl.1}
  #allocation0 [shape = 'u32[]', space=smem, size = 0x4, offset = 0x4, fixed_abs, tag = 'smem constant byte address 0x4 - core index']
  #allocation1 [shape = 'u32[144,128]{1,0:T(1,128)}', space=vmem, size = 0x12000, scoped, tag = 'internal scratch']
  %s0 = inlined_call_operand.vmem [shape: bf16[128,256], index: 0, kind: input, shape index: {}]
  %s1 = inlined_call_operand.vmem [shape: bf16[256,16], index: 1, kind: input, shape index: {}]
  %s2 = inlined_call_operand.vmem [shape: f32[1,16], index: 2, kind: input, shape index: {}]
  %s3 = inlined_call_operand.vmem [shape: bf16[256,32], index: 3, kind: input, shape index: {}]
  %s4 = inlined_call_operand.vmem [shape: f32[1,32], index: 4, kind: input, shape index: {}]
  %s5 = inlined_call_operand.vmem [shape: f32[128,6], index: 5, kind: input, shape index: {}]
  %s6 = inlined_call_operand.vmem [shape: f32[1,6], index: 6, kind: input, shape index: {}]
  %s7 = inlined_call_operand.hbm [shape: f32[2,6], index: 7, kind: output, shape index: {}]
  %s8 = sld [smem:[#allocation0]]
  $region38: #{_forward_impl.1} parent=0
    _
  %s10 = ssub.s32 1, %s8
  %s11 = scalar_select 0, %s10, %s8
  $region1: #{_forward_impl.1} parent=0
    #allocation2 [shape = 'u8[1024]{0}', space=vmem, size = 0x400, scoped, tag = 'output window, operand 0, single buffered']
    #allocation3 [shape = 's32[1]{0}', space=sflag, size = 0x4, scoped, tag = 'scoped memory for _forward_impl.1']
    %12 = vsyncpa [#allocation3], 0
    // Predicated region
    $region2: #{_forward_impl.1} parent=1 // pred_check
      _
    $region3: #{_forward_impl.1} parent=1 // pred_check_branch
      %14 = sbr.rel (0) target = $region5
    $region4: #{_forward_impl.1} parent=1 // pred_region
      _
    $region5: #{_forward_impl.1} parent=1 // pred_fallthru
      _
    // Predicated region
    $region6: #{_forward_impl.1} parent=1 // pred_check
      _
    $region7: #{_forward_impl.1} parent=1 // pred_check_branch
      %16 = sbr.rel (0) target = $region9
    $region8: #{_forward_impl.1} parent=1 // pred_region
      _
    $region9: #{_forward_impl.1} parent=1 // pred_fallthru
      _
    // Predicated region
    $region10: #{_forward_impl.1} parent=1 // pred_check
      _
    $region11: #{_forward_impl.1} parent=1 // pred_check_branch
      %18 = sbr.rel (0) target = $region13
    $region12: #{_forward_impl.1} parent=1 // pred_region
      _
    $region13: #{_forward_impl.1} parent=1 // pred_fallthru
      _
    // Predicated region
    $region14: #{_forward_impl.1} parent=1 // pred_check
      _
    $region15: #{_forward_impl.1} parent=1 // pred_check_branch
      %20 = sbr.rel (0) target = $region17
    $region16: #{_forward_impl.1} parent=1 // pred_region
      _
    $region17: #{_forward_impl.1} parent=1 // pred_fallthru
      _
    // Predicated region
    $region18: #{_forward_impl.1} parent=1 // pred_check
      _
    $region19: #{_forward_impl.1} parent=1 // pred_check_branch
      %22 = sbr.rel (0) target = $region21
    $region20: #{_forward_impl.1} parent=1 // pred_region
      _
    $region21: #{_forward_impl.1} parent=1 // pred_fallthru
      _
    // Predicated region
    $region22: #{_forward_impl.1} parent=1 // pred_check
      _
    $region23: #{_forward_impl.1} parent=1 // pred_check_branch
      %24 = sbr.rel (0) target = $region25
    $region24: #{_forward_impl.1} parent=1 // pred_region
      _
    $region25: #{_forward_impl.1} parent=1 // pred_fallthru
      _
    // Predicated region
    $region26: #{_forward_impl.1} parent=1 // pred_check
      _
    $region27: #{_forward_impl.1} parent=1 // pred_check_branch
      %26 = sbr.rel (0) target = $region29
    $region28: #{_forward_impl.1} parent=1 // pred_region
      _
    $region29: #{_forward_impl.1} parent=1 // pred_fallthru
      _
    %v28 = vld [vmem:[%s0] sm:$0xff]
    %v29 = vld [vmem:[%s0 + $0x8] sm:$0xff]
    %v30 = vld [vmem:[%s0 + $0x10] sm:$0xff]
    %v31 = vld [vmem:[%s0 + $0x18] sm:$0xff]
    %v32 = vld [vmem:[%s0 + $0x20] sm:$0xff]
    %v33 = vld [vmem:[%s0 + $0x28] sm:$0xff]
    %v34 = vld [vmem:[%s0 + $0x30] sm:$0xff]
    %v35 = vld [vmem:[%s0 + $0x38] sm:$0xff]
    %v36 = vld [vmem:[%s0 + $0x40] sm:$0xff]
    %v37 = vld [vmem:[%s0 + $0x48] sm:$0xff]
    %v38 = vld [vmem:[%s0 + $0x50] sm:$0xff]
    %v39 = vld [vmem:[%s0 + $0x58] sm:$0xff]
    %v40 = vld [vmem:[%s0 + $0x60] sm:$0xff]
    %v41 = vld [vmem:[%s0 + $0x68] sm:$0xff]
    %v42 = vld [vmem:[%s0 + $0x70] sm:$0xff]
    %v43 = vld [vmem:[%s0 + $0x78] sm:$0xff]
    %v44 = vld [vmem:[%s1] sm:$0xf]
    %v45 = vld [vmem:[%s1 + $0x4] sm:$0xf]
    %v46 = vld [vmem:[%s1 + $0x8] sm:$0xf]
    %v47 = vld [vmem:[%s1 + $0xc] sm:$0xf]
    %v48 = vld [vmem:[%s1 + $0x10] sm:$0xf]
    %v49 = vld [vmem:[%s1 + $0x14] sm:$0xf]
    %v50 = vld [vmem:[%s1 + $0x18] sm:$0xf]
    %v51 = vld [vmem:[%s1 + $0x1c] sm:$0xf]
    %v52 = vld [vmem:[%s1 + $0x20] sm:$0xf]
    %v53 = vld [vmem:[%s1 + $0x24] sm:$0xf]
    %v54 = vld [vmem:[%s1 + $0x28] sm:$0xf]
    %v55 = vld [vmem:[%s1 + $0x2c] sm:$0xf]
    %v56 = vld [vmem:[%s1 + $0x30] sm:$0xf]
    %v57 = vld [vmem:[%s1 + $0x34] sm:$0xf]
    %v58 = vld [vmem:[%s1 + $0x38] sm:$0xf]
    %v59 = vld [vmem:[%s1 + $0x3c] sm:$0xf]
    %v60 = vld [vmem:[%s1 + $0x40] sm:$0xf]
    %v61 = vld [vmem:[%s1 + $0x44] sm:$0xf]
    %v62 = vld [vmem:[%s1 + $0x48] sm:$0xf]
    %v63 = vld [vmem:[%s1 + $0x4c] sm:$0xf]
    %v64 = vld [vmem:[%s1 + $0x50] sm:$0xf]
    %v65 = vld [vmem:[%s1 + $0x54] sm:$0xf]
    %v66 = vld [vmem:[%s1 + $0x58] sm:$0xf]
    %v67 = vld [vmem:[%s1 + $0x5c] sm:$0xf]
    %v68 = vld [vmem:[%s1 + $0x60] sm:$0xf]
    %v69 = vld [vmem:[%s1 + $0x64] sm:$0xf]
    %v70 = vld [vmem:[%s1 + $0x68] sm:$0xf]
    %v71 = vld [vmem:[%s1 + $0x6c] sm:$0xf]
    %v72 = vld [vmem:[%s1 + $0x70] sm:$0xf]
    %v73 = vld [vmem:[%s1 + $0x74] sm:$0xf]
    %v74 = vld [vmem:[%s1 + $0x78] sm:$0xf]
    %v75 = vld [vmem:[%s1 + $0x7c] sm:$0xf]
    %v76 = vld [vmem:[%s2] sm:$0x1]
    %v78 = vlaneseq
    %v79 = vshrl.u32 %v78, 7
    %v80 = vsub.s32 0, %v79
    %v81 = vrot.slane %v76, %v80
    %v99 = vunpack.c.l.b16 %v28
    %v100 = vunpack.c.h.b16 %v28
    %v101 = vunpack.c.l.b16 %v29
    %v102 = vunpack.c.h.b16 %v29
    %v103 = vunpack.c.l.b16 %v30
    %v104 = vunpack.c.h.b16 %v30
    %v105 = vunpack.c.l.b16 %v31
    %v106 = vunpack.c.h.b16 %v31
    %v107 = vunpack.c.l.b16 %v32
    %v108 = vunpack.c.h.b16 %v32
    %v109 = vunpack.c.l.b16 %v33
    %v110 = vunpack.c.h.b16 %v33
    %v111 = vunpack.c.l.b16 %v34
    %v112 = vunpack.c.h.b16 %v34
    %v113 = vunpack.c.l.b16 %v35
    %v114 = vunpack.c.h.b16 %v35
    %v115 = vunpack.c.l.b16 %v36
    %v116 = vunpack.c.h.b16 %v36
    %v117 = vunpack.c.l.b16 %v37
    %v118 = vunpack.c.h.b16 %v37
    %v119 = vunpack.c.l.b16 %v38
    %v120 = vunpack.c.h.b16 %v38
    %v121 = vunpack.c.l.b16 %v39
    %v122 = vunpack.c.h.b16 %v39
    %v123 = vunpack.c.l.b16 %v40
    %v124 = vunpack.c.h.b16 %v40
    %v125 = vunpack.c.l.b16 %v41
    %v126 = vunpack.c.h.b16 %v41
    %v127 = vunpack.c.l.b16 %v42
    %v128 = vunpack.c.h.b16 %v42
    %v129 = vunpack.c.l.b16 %v43
    %v130 = vunpack.c.h.b16 %v43
    %v131 = vpack.c.b16 %v101, %v99
    %v132 = vpack.c.b16 %v102, %v100
    %v133 = vpack.c.b16 %v105, %v103
    %v134 = vpack.c.b16 %v106, %v104
    %v135 = vpack.c.b16 %v109, %v107
    %v136 = vpack.c.b16 %v110, %v108
    %v137 = vpack.c.b16 %v113, %v111
    %v138 = vpack.c.b16 %v114, %v112
    %v139 = vpack.c.b16 %v117, %v115
    %v140 = vpack.c.b16 %v118, %v116
    %v141 = vpack.c.b16 %v121, %v119
    %v142 = vpack.c.b16 %v122, %v120
    %v143 = vpack.c.b16 %v125, %v123
    %v144 = vpack.c.b16 %v126, %v124
    %v145 = vpack.c.b16 %v129, %v127
    %v146 = vpack.c.b16 %v130, %v128
    %v195 = vunpack.c.l.b16 %v44
    %v196 = vunpack.c.l.b16 %v45
    %v197 = vunpack.c.l.b16 %v46
    %v198 = vunpack.c.l.b16 %v47
    %v199 = vunpack.c.l.b16 %v48
    %v200 = vunpack.c.l.b16 %v49
    %v201 = vunpack.c.l.b16 %v50
    %v202 = vunpack.c.l.b16 %v51
    %v203 = vunpack.c.l.b16 %v52
    %v204 = vunpack.c.l.b16 %v53
    %v205 = vunpack.c.l.b16 %v54
    %v206 = vunpack.c.l.b16 %v55
    %v207 = vunpack.c.l.b16 %v56
    %v208 = vunpack.c.l.b16 %v57
    %v209 = vunpack.c.l.b16 %v58
    %v210 = vunpack.c.l.b16 %v59
    %v211 = vunpack.c.l.b16 %v60
    %v212 = vunpack.c.l.b16 %v61
    %v213 = vunpack.c.l.b16 %v62
    %v214 = vunpack.c.l.b16 %v63
    %v215 = vunpack.c.l.b16 %v64
    %v216 = vunpack.c.l.b16 %v65
    %v217 = vunpack.c.l.b16 %v66
    %v218 = vunpack.c.l.b16 %v67
    %v219 = vunpack.c.l.b16 %v68
    %v220 = vunpack.c.l.b16 %v69
    %v221 = vunpack.c.l.b16 %v70
    %v222 = vunpack.c.l.b16 %v71
    %v223 = vunpack.c.l.b16 %v72
    %v224 = vunpack.c.l.b16 %v73
    %v225 = vunpack.c.l.b16 %v74
    %v226 = vunpack.c.l.b16 %v75
    %v227 = vpack.c.b16 %v196, %v195
    %v228 = vpack.c.b16 %v198, %v197
    %v229 = vpack.c.b16 %v200, %v199
    %v230 = vpack.c.b16 %v202, %v201
    %v231 = vpack.c.b16 %v204, %v203
    %v232 = vpack.c.b16 %v206, %v205
    %v233 = vpack.c.b16 %v208, %v207
    %v234 = vpack.c.b16 %v210, %v209
    %v235 = vpack.c.b16 %v212, %v211
    %v236 = vpack.c.b16 %v214, %v213
    %v237 = vpack.c.b16 %v216, %v215
    %v238 = vpack.c.b16 %v218, %v217
    %v239 = vpack.c.b16 %v220, %v219
    %v240 = vpack.c.b16 %v222, %v221
    %v241 = vpack.c.b16 %v224, %v223
    %v242 = vpack.c.b16 %v226, %v225
    %259 = vmatprep.subr.bf16.mxu0 0
    %260 = vmatpush1.bf16.msra.mxu0 %v227
    %261 = vmatprep.subr.bf16.mxu0 0
    %262 = vmatpush1.bf16.msra.mxu0 %v228
    %263 = vmatprep.subr.bf16.mxu0 0
    %264 = vmatpush1.bf16.msra.mxu0 %v229
    %265 = vmatprep.subr.bf16.mxu0 0
    %266 = vmatpush1.bf16.msra.mxu0 %v230
    %267 = vmatprep.subr.bf16.mxu0 0
    %268 = vmatpush1.bf16.msra.mxu0 %v231
    %269 = vmatprep.subr.bf16.mxu0 0
    %270 = vmatpush1.bf16.msra.mxu0 %v232
    %271 = vmatprep.subr.bf16.mxu0 0
    %272 = vmatpush1.bf16.msra.mxu0 %v233
    %273 = vmatprep.subr.bf16.mxu0 0
    %274 = vmatpush1.bf16.msra.mxu0 %v234
    %275 = vmatprep.subr.bf16.mxu0 0
    %276 = vmatpush1.bf16.msra.mxu0 %v235
    %277 = vmatprep.subr.bf16.mxu0 0
    %278 = vmatpush1.bf16.msra.mxu0 %v236
    %279 = vmatprep.subr.bf16.mxu0 0
    %280 = vmatpush1.bf16.msra.mxu0 %v237
    %281 = vmatprep.subr.bf16.mxu0 0
    %282 = vmatpush1.bf16.msra.mxu0 %v238
    %283 = vmatprep.subr.bf16.mxu0 0
    %284 = vmatpush1.bf16.msra.mxu0 %v239
    %285 = vmatprep.subr.bf16.mxu0 0
    %286 = vmatpush1.bf16.msra.mxu0 %v240
    %287 = vmatprep.subr.bf16.mxu0 0
    %288 = vmatpush1.bf16.msra.mxu0 %v241
    %289 = vmatprep.subr.bf16.mxu0 0
    %290 = vmatpush1.bf16.msra.mxu0 %v242
    %291 = vmatprep.mubr.bf16.mxu0 %v132
    %292 = vmatmul.mubr.bf16.gmra.mrb[0].mxu0 %v131
    %v293 = vpop.f32.mrb[0].mxu0
    %v294 = vadd.f32 %v81, %v293
    %v295 = vpop.f32.mrb[0].mxu0
    %v296 = vpop.f32.mrb[0].mxu0
    %v297 = vadd.f32 %v81, %v296
    %v298 = vpop.f32.mrb[0].mxu0
    %299 = vmatprep.mubr.bf16.mxu0 %v134
    %300 = vmatmul.mubr.bf16.gmra.mrb[0].mxu0 %v133
    %v301 = vpop.f32.mrb[0].mxu0
    %v302 = vadd.f32 %v81, %v301
    %v303 = vpop.f32.mrb[0].mxu0
    %v304 = vpop.f32.mrb[0].mxu0
    %v305 = vadd.f32 %v81, %v304
    %v306 = vpop.f32.mrb[0].mxu0
    %307 = vmatprep.mubr.bf16.mxu0 %v136
    %308 = vmatmul.mubr.bf16.gmra.mrb[0].mxu0 %v135
    %v309 = vpop.f32.mrb[0].mxu0
    %v310 = vadd.f32 %v81, %v309
    %v311 = vpop.f32.mrb[0].mxu0
    %v312 = vpop.f32.mrb[0].mxu0
    %v313 = vadd.f32 %v81, %v312
    %v314 = vpop.f32.mrb[0].mxu0
    %315 = vmatprep.mubr.bf16.mxu0 %v138
    %316 = vmatmul.mubr.bf16.gmra.mrb[0].mxu0 %v137
    %v317 = vpop.f32.mrb[0].mxu0
    %v318 = vadd.f32 %v81, %v317
    %v319 = vpop.f32.mrb[0].mxu0
    %v320 = vpop.f32.mrb[0].mxu0
    %v321 = vadd.f32 %v81, %v320
    %v322 = vpop.f32.mrb[0].mxu0
    %323 = vmatprep.mubr.bf16.mxu0 %v140
    %324 = vmatmul.mubr.bf16.gmra.mrb[0].mxu0 %v139
    %v325 = vpop.f32.mrb[0].mxu0
    %v326 = vadd.f32 %v81, %v325
    %v327 = vpop.f32.mrb[0].mxu0
    %v328 = vpop.f32.mrb[0].mxu0
    %v329 = vadd.f32 %v81, %v328
    %v330 = vpop.f32.mrb[0].mxu0
    %331 = vmatprep.mubr.bf16.mxu0 %v142
    %332 = vmatmul.mubr.bf16.gmra.mrb[0].mxu0 %v141
    %v333 = vpop.f32.mrb[0].mxu0
    %v334 = vadd.f32 %v81, %v333
    %v335 = vpop.f32.mrb[0].mxu0
    %v336 = vpop.f32.mrb[0].mxu0
    %v337 = vadd.f32 %v81, %v336
    %v338 = vpop.f32.mrb[0].mxu0
    %339 = vmatprep.mubr.bf16.mxu0 %v144
    %340 = vmatmul.mubr.bf16.gmra.mrb[0].mxu0 %v143
    %v341 = vpop.f32.mrb[0].mxu0
    %v342 = vadd.f32 %v81, %v341
    %v343 = vpop.f32.mrb[0].mxu0
    %v344 = vpop.f32.mrb[0].mxu0
    %v345 = vadd.f32 %v81, %v344
    %v346 = vpop.f32.mrb[0].mxu0
    %347 = vmatprep.mubr.bf16.mxu0 %v146
    %348 = vmatmul.mubr.bf16.gmra.mrb[0].mxu0 %v145
    %v349 = vpop.f32.mrb[0].mxu0
    %v350 = vadd.f32 %v81, %v349
    %v351 = vpop.f32.mrb[0].mxu0
    %v352 = vpop.f32.mrb[0].mxu0
    %v353 = vadd.f32 %v81, %v352
    %v354 = vpop.f32.mrb[0].mxu0
    %355 = vdwg.mxu0
    %v356 = vmax.f32 %v294, 0.0
    %v357 = vmax.f32 %v297, 0.0
    %v358 = vmax.f32 %v302, 0.0
    %v359 = vmax.f32 %v305, 0.0
    %v360 = vmax.f32 %v310, 0.0
    %v361 = vmax.f32 %v313, 0.0
    %v362 = vmax.f32 %v318, 0.0
    %v363 = vmax.f32 %v321, 0.0
    %v364 = vmax.f32 %v326, 0.0
    %v365 = vmax.f32 %v329, 0.0
    %v366 = vmax.f32 %v334, 0.0
    %v367 = vmax.f32 %v337, 0.0
    %v368 = vmax.f32 %v342, 0.0
    %v369 = vmax.f32 %v345, 0.0
    %v370 = vmax.f32 %v350, 0.0
    %v371 = vmax.f32 %v353, 0.0
    %v372 = vpack.c.bf16 %v357, %v356
    %v373 = vpack.c.bf16 %v359, %v358
    %v374 = vpack.c.bf16 %v361, %v360
    %v375 = vpack.c.bf16 %v363, %v362
    %v376 = vpack.c.bf16 %v365, %v364
    %v377 = vpack.c.bf16 %v367, %v366
    %v378 = vpack.c.bf16 %v369, %v368
    %v379 = vpack.c.bf16 %v371, %v370
    %v380 = vld [vmem:[%s3] sm:$0xf]
    %v381 = vld [vmem:[%s3 + $0x4] sm:$0xf]
    %v382 = vld [vmem:[%s3 + $0x8] sm:$0xf]
    %v383 = vld [vmem:[%s3 + $0xc] sm:$0xf]
    %v385 = vrot.slane %v372, 4
    %v388 = vunpack.c.l.b16 %v382
    %v389 = vunpack.c.l.b16 %v383
    %v390 = vpack.c.b16 %v389, %v388
    %vm392 = vcmask 130048
    %v394 = vsel %vm392, %v385, 0
    %396 = vmatprep.subr.bf16.mxu0 0
    %397 = vmatpush1.bf16.msra.mxu0 %v390
    %398 = vmatprep.subr.bf16.mxu0 0
    %399 = vmatpush1.bf16.msra.mxu0 0
    %400 = vmatprep.subr.bf16.mxu0 0
    %401 = vmatpush1.bf16.msra.mxu0 0
    %402 = vmatprep.subr.bf16.mxu0 0
    %403 = vmatpush1.bf16.msra.mxu0 0
    %404 = vmatprep.subr.bf16.mxu0 0
    %405 = vmatpush1.bf16.msra.mxu0 0
    %406 = vmatprep.subr.bf16.mxu0 0
    %407 = vmatpush1.bf16.msra.mxu0 0
    %408 = vmatprep.subr.bf16.mxu0 0
    %409 = vmatpush1.bf16.msra.mxu0 0
    %410 = vmatprep.subr.bf16.mxu0 0
    %411 = vmatpush1.bf16.msra.mxu0 0
    %412 = vmatprep.subr.bf16.mxu0 0
    %413 = vmatpush1.bf16.msra.mxu0 0
    %414 = vmatprep.subr.bf16.mxu0 0
    %415 = vmatpush1.bf16.msra.mxu0 0
    %416 = vmatprep.subr.bf16.mxu0 0
    %417 = vmatpush1.bf16.msra.mxu0 0
    %418 = vmatprep.subr.bf16.mxu0 0
    %419 = vmatpush1.bf16.msra.mxu0 0
    %420 = vmatprep.subr.bf16.mxu0 0
    %421 = vmatpush1.bf16.msra.mxu0 0
    %422 = vmatprep.subr.bf16.mxu0 0
    %423 = vmatpush1.bf16.msra.mxu0 0
    %424 = vmatprep.subr.bf16.mxu0 0
    %425 = vmatpush1.bf16.msra.mxu0 0
    %426 = vmatprep.subr.bf16.mxu0 0
    %427 = vmatpush1.bf16.msra.mxu0 0
    %428 = vmatprep.mubr.bf16.mxu0 0
    %429 = vmatmul.mubr.bf16.gmra.mrb[0].mxu0 %v394
    %v430 = vpop.f32.mrb[0].mxu0
    %v431 = vadd.f32 0.0, %v430
    %v432 = vpop.f32.mrb[0].mxu0
    %v433 = vpop.f32.mrb[0].mxu0
    %v434 = vpop.f32.mrb[0].mxu0
    %435 = vdwg.mxu0
    %v438 = vunpack.c.l.b16 %v380
    %v439 = vunpack.c.l.b16 %v381
    %v440 = vpack.c.b16 %v439, %v438
    %v443 = vsel %vm392, %v372, 0
    %445 = vmatprep.subr.bf16.mxu0 0
    %446 = vmatpush1.bf16.msra.mxu0 %v440
    %447 = vmatprep.subr.bf16.mxu0 0
    %448 = vmatpush1.bf16.msra.mxu0 0
    %449 = vmatprep.subr.bf16.mxu0 0
    %450 = vmatpush1.bf16.msra.mxu0 0
    %451 = vmatprep.subr.bf16.mxu0 0
    %452 = vmatpush1.bf16.msra.mxu0 0
    %453 = vmatprep.subr.bf16.mxu0 0
    %454 = vmatpush1.bf16.msra.mxu0 0
    %455 = vmatprep.subr.bf16.mxu0 0
    %456 = vmatpush1.bf16.msra.mxu0 0
    %457 = vmatprep.subr.bf16.mxu0 0
    %458 = vmatpush1.bf16.msra.mxu0 0
    %459 = vmatprep.subr.bf16.mxu0 0
    %460 = vmatpush1.bf16.msra.mxu0 0
    %461 = vmatprep.subr.bf16.mxu0 0
    %462 = vmatpush1.bf16.msra.mxu0 0
    %463 = vmatprep.subr.bf16.mxu0 0
    %464 = vmatpush1.bf16.msra.mxu0 0
    %465 = vmatprep.subr.bf16.mxu0 0
    %466 = vmatpush1.bf16.msra.mxu0 0
    %467 = vmatprep.subr.bf16.mxu0 0
    %468 = vmatpush1.bf16.msra.mxu0 0
    %469 = vmatprep.subr.bf16.mxu0 0
    %470 = vmatpush1.bf16.msra.mxu0 0
    %471 = vmatprep.subr.bf16.mxu0 0
    %472 = vmatpush1.bf16.msra.mxu0 0
    %473 = vmatprep.subr.bf16.mxu0 0
    %474 = vmatpush1.bf16.msra.mxu0 0
    %475 = vmatprep.subr.bf16.mxu0 0
    %476 = vmatpush1.bf16.msra.mxu0 0
    %477 = vmatprep.mubr.bf16.mxu0 0
    %478 = vmatmul.mubr.bf16.gmra.mrb[0].mxu0 %v443
    %v479 = vpop.f32.mrb[0].mxu0
    %v480 = vadd.f32 %v431, %v479
    %v481 = vpop.f32.mrb[0].mxu0
    %v482 = vpop.f32.mrb[0].mxu0
    %v483 = vpop.f32.mrb[0].mxu0
    %484 = vdwg.mxu0
    %v485 = vld [vmem:[%s3 + $0x10] sm:$0xf]
    %v486 = vld [vmem:[%s3 + $0x14] sm:$0xf]
    %v489 = vunpack.c.l.b16 %v485
    %v490 = vunpack.c.l.b16 %v486
    %v491 = vpack.c.b16 %v490, %v489
    %v494 = vsel %vm392, %v373, 0
    %496 = vmatprep.subr.bf16.mxu0 0
    %497 = vmatpush1.bf16.msra.mxu0 %v491
    %498 = vmatprep.subr.bf16.mxu0 0
    %499 = vmatpush1.bf16.msra.mxu0 0
    %500 = vmatprep.subr.bf16.mxu0 0
    %501 = vmatpush1.bf16.msra.mxu0 0
    %502 = vmatprep.subr.bf16.mxu0 0
    %503 = vmatpush1.bf16.msra.mxu0 0
    %504 = vmatprep.subr.bf16.mxu0 0
    %505 = vmatpush1.bf16.msra.mxu0 0
    %506 = vmatprep.subr.bf16.mxu0 0
    %507 = vmatpush1.bf16.msra.mxu0 0
    %508 = vmatprep.subr.bf16.mxu0 0
    %509 = vmatpush1.bf16.msra.mxu0 0
    %510 = vmatprep.subr.bf16.mxu0 0
    %511 = vmatpush1.bf16.msra.mxu0 0
    %512 = vmatprep.subr.bf16.mxu0 0
    %513 = vmatpush1.bf16.msra.mxu0 0
    %514 = vmatprep.subr.bf16.mxu0 0
    %515 = vmatpush1.bf16.msra.mxu0 0
    %516 = vmatprep.subr.bf16.mxu0 0
    %517 = vmatpush1.bf16.msra.mxu0 0
    %518 = vmatprep.subr.bf16.mxu0 0
    %519 = vmatpush1.bf16.msra.mxu0 0
    %520 = vmatprep.subr.bf16.mxu0 0
    %521 = vmatpush1.bf16.msra.mxu0 0
    %522 = vmatprep.subr.bf16.mxu0 0
    %523 = vmatpush1.bf16.msra.mxu0 0
    %524 = vmatprep.subr.bf16.mxu0 0
    %525 = vmatpush1.bf16.msra.mxu0 0
    %526 = vmatprep.subr.bf16.mxu0 0
    %527 = vmatpush1.bf16.msra.mxu0 0
    %528 = vmatprep.mubr.bf16.mxu0 0
    %529 = vmatmul.mubr.bf16.gmra.mrb[0].mxu0 %v494
    %v530 = vpop.f32.mrb[0].mxu0
    %v531 = vadd.f32 0.0, %v530
    %v532 = vpop.f32.mrb[0].mxu0
    %v533 = vpop.f32.mrb[0].mxu0
    %v534 = vpop.f32.mrb[0].mxu0
    %535 = vdwg.mxu0
    %v536 = vadd.f32 %v480, %v531
    %v537 = vld [vmem:[%s3 + $0x18] sm:$0xf]
    %v538 = vld [vmem:[%s3 + $0x1c] sm:$0xf]
    %v540 = vrot.slane %v373, 4
    %v543 = vunpack.c.l.b16 %v537
    %v544 = vunpack.c.l.b16 %v538
    %v545 = vpack.c.b16 %v544, %v543
    %v548 = vsel %vm392, %v540, 0
    %550 = vmatprep.subr.bf16.mxu0 0
    %551 = vmatpush1.bf16.msra.mxu0 %v545
    %552 = vmatprep.subr.bf16.mxu0 0
    %553 = vmatpush1.bf16.msra.mxu0 0
    %554 = vmatprep.subr.bf16.mxu0 0
    %555 = vmatpush1.bf16.msra.mxu0 0
    %556 = vmatprep.subr.bf16.mxu0 0
    %557 = vmatpush1.bf16.msra.mxu0 0
    %558 = vmatprep.subr.bf16.mxu0 0
    %559 = vmatpush1.bf16.msra.mxu0 0
    %560 = vmatprep.subr.bf16.mxu0 0
    %561 = vmatpush1.bf16.msra.mxu0 0
    %562 = vmatprep.subr.bf16.mxu0 0
    %563 = vmatpush1.bf16.msra.mxu0 0
    %564 = vmatprep.subr.bf16.mxu0 0
    %565 = vmatpush1.bf16.msra.mxu0 0
    %566 = vmatprep.subr.bf16.mxu0 0
    %567 = vmatpush1.bf16.msra.mxu0 0
    %568 = vmatprep.subr.bf16.mxu0 0
    %569 = vmatpush1.bf16.msra.mxu0 0
    %570 = vmatprep.subr.bf16.mxu0 0
    %571 = vmatpush1.bf16.msra.mxu0 0
    %572 = vmatprep.subr.bf16.mxu0 0
    %573 = vmatpush1.bf16.msra.mxu0 0
    %574 = vmatprep.subr.bf16.mxu0 0
    %575 = vmatpush1.bf16.msra.mxu0 0
    %576 = vmatprep.subr.bf16.mxu0 0
    %577 = vmatpush1.bf16.msra.mxu0 0
    %578 = vmatprep.subr.bf16.mxu0 0
    %579 = vmatpush1.bf16.msra.mxu0 0
    %580 = vmatprep.subr.bf16.mxu0 0
    %581 = vmatpush1.bf16.msra.mxu0 0
    %582 = vmatprep.mubr.bf16.mxu0 0
    %583 = vmatmul.mubr.bf16.gmra.mrb[0].mxu0 %v548
    %v584 = vpop.f32.mrb[0].mxu0
    %v585 = vadd.f32 0.0, %v584
    %v586 = vpop.f32.mrb[0].mxu0
    %v587 = vpop.f32.mrb[0].mxu0
    %v588 = vpop.f32.mrb[0].mxu0
    %589 = vdwg.mxu0
    %v590 = vadd.f32 %v536, %v585
    %v591 = vld [vmem:[%s3 + $0x20] sm:$0xf]
    %v592 = vld [vmem:[%s3 + $0x24] sm:$0xf]
    %v595 = vunpack.c.l.b16 %v591
    %v596 = vunpack.c.l.b16 %v592
    %v597 = vpack.c.b16 %v596, %v595
    %v600 = vsel %vm392, %v374, 0
    %602 = vmatprep.subr.bf16.mxu0 0
    %603 = vmatpush1.bf16.msra.mxu0 %v597
    %604 = vmatprep.subr.bf16.mxu0 0
    %605 = vmatpush1.bf16.msra.mxu0 0
    %606 = vmatprep.subr.bf16.mxu0 0
    %607 = vmatpush1.bf16.msra.mxu0 0
    %608 = vmatprep.subr.bf16.mxu0 0
    %609 = vmatpush1.bf16.msra.mxu0 0
    %610 = vmatprep.subr.bf16.mxu0 0
    %611 = vmatpush1.bf16.msra.mxu0 0
    %612 = vmatprep.subr.bf16.mxu0 0
    %613 = vmatpush1.bf16.msra.mxu0 0
    %614 = vmatprep.subr.bf16.mxu0 0
    %615 = vmatpush1.bf16.msra.mxu0 0
    %616 = vmatprep.subr.bf16.mxu0 0
    %617 = vmatpush1.bf16.msra.mxu0 0
    %618 = vmatprep.subr.bf16.mxu0 0
    %619 = vmatpush1.bf16.msra.mxu0 0
    %620 = vmatprep.subr.bf16.mxu0 0
    %621 = vmatpush1.bf16.msra.mxu0 0
    %622 = vmatprep.subr.bf16.mxu0 0
    %623 = vmatpush1.bf16.msra.mxu0 0
    %624 = vmatprep.subr.bf16.mxu0 0
    %625 = vmatpush1.bf16.msra.mxu0 0
    %626 = vmatprep.subr.bf16.mxu0 0
    %627 = vmatpush1.bf16.msra.mxu0 0
    %628 = vmatprep.subr.bf16.mxu0 0
    %629 = vmatpush1.bf16.msra.mxu0 0
    %630 = vmatprep.subr.bf16.mxu0 0
    %631 = vmatpush1.bf16.msra.mxu0 0
    %632 = vmatprep.subr.bf16.mxu0 0
    %633 = vmatpush1.bf16.msra.mxu0 0
    %634 = vmatprep.mubr.bf16.mxu0 0
    %635 = vmatmul.mubr.bf16.gmra.mrb[0].mxu0 %v600
    %v636 = vpop.f32.mrb[0].mxu0
    %v637 = vadd.f32 0.0, %v636
    %v638 = vpop.f32.mrb[0].mxu0
    %v639 = vpop.f32.mrb[0].mxu0
    %v640 = vpop.f32.mrb[0].mxu0
    %641 = vdwg.mxu0
    %v642 = vadd.f32 %v590, %v637
    %v643 = vld [vmem:[%s3 + $0x28] sm:$0xf]
    %v644 = vld [vmem:[%s3 + $0x2c] sm:$0xf]
    %v646 = vrot.slane %v374, 4
    %v649 = vunpack.c.l.b16 %v643
    %v650 = vunpack.c.l.b16 %v644
    %v651 = vpack.c.b16 %v650, %v649
    %v654 = vsel %vm392, %v646, 0
    %656 = vmatprep.subr.bf16.mxu0 0
    %657 = vmatpush1.bf16.msra.mxu0 %v651
    %658 = vmatprep.subr.bf16.mxu0 0
    %659 = vmatpush1.bf16.msra.mxu0 0
    %660 = vmatprep.subr.bf16.mxu0 0
    %661 = vmatpush1.bf16.msra.mxu0 0
    %662 = vmatprep.subr.bf16.mxu0 0
    %663 = vmatpush1.bf16.msra.mxu0 0
    %664 = vmatprep.subr.bf16.mxu0 0
    %665 = vmatpush1.bf16.msra.mxu0 0
    %666 = vmatprep.subr.bf16.mxu0 0
    %667 = vmatpush1.bf16.msra.mxu0 0
    %668 = vmatprep.subr.bf16.mxu0 0
    %669 = vmatpush1.bf16.msra.mxu0 0
    %670 = vmatprep.subr.bf16.mxu0 0
    %671 = vmatpush1.bf16.msra.mxu0 0
    %672 = vmatprep.subr.bf16.mxu0 0
    %673 = vmatpush1.bf16.msra.mxu0 0
    %674 = vmatprep.subr.bf16.mxu0 0
    %675 = vmatpush1.bf16.msra.mxu0 0
    %676 = vmatprep.subr.bf16.mxu0 0
    %677 = vmatpush1.bf16.msra.mxu0 0
    %678 = vmatprep.subr.bf16.mxu0 0
    %679 = vmatpush1.bf16.msra.mxu0 0
    %680 = vmatprep.subr.bf16.mxu0 0
    %681 = vmatpush1.bf16.msra.mxu0 0
    %682 = vmatprep.subr.bf16.mxu0 0
    %683 = vmatpush1.bf16.msra.mxu0 0
    %684 = vmatprep.subr.bf16.mxu0 0
    %685 = vmatpush1.bf16.msra.mxu0 0
    %686 = vmatprep.subr.bf16.mxu0 0
    %687 = vmatpush1.bf16.msra.mxu0 0
    %688 = vmatprep.mubr.bf16.mxu0 0
    %689 = vmatmul.mubr.bf16.gmra.mrb[0].mxu0 %v654
    %v690 = vpop.f32.mrb[0].mxu0
    %v691 = vadd.f32 0.0, %v690
    %v692 = vpop.f32.mrb[0].mxu0
    %v693 = vpop.f32.mrb[0].mxu0
    %v694 = vpop.f32.mrb[0].mxu0
    %695 = vdwg.mxu0
    %v696 = vadd.f32 %v642, %v691
    %v697 = vld [vmem:[%s3 + $0x30] sm:$0xf]
    %v698 = vld [vmem:[%s3 + $0x34] sm:$0xf]
    %v701 = vunpack.c.l.b16 %v697
    %v702 = vunpack.c.l.b16 %v698
    %v703 = vpack.c.b16 %v702, %v701
    %v706 = vsel %vm392, %v375, 0
    %708 = vmatprep.subr.bf16.mxu0 0
    %709 = vmatpush1.bf16.msra.mxu0 %v703
    %710 = vmatprep.subr.bf16.mxu0 0
    %711 = vmatpush1.bf16.msra.mxu0 0
    %712 = vmatprep.subr.bf16.mxu0 0
    %713 = vmatpush1.bf16.msra.mxu0 0
    %714 = vmatprep.subr.bf16.mxu0 0
    %715 = vmatpush1.bf16.msra.mxu0 0
    %716 = vmatprep.subr.bf16.mxu0 0
    %717 = vmatpush1.bf16.msra.mxu0 0
    %718 = vmatprep.subr.bf16.mxu0 0
    %719 = vmatpush1.bf16.msra.mxu0 0
    %720 = vmatprep.subr.bf16.mxu0 0
    %721 = vmatpush1.bf16.msra.mxu0 0
    %722 = vmatprep.subr.bf16.mxu0 0
    %723 = vmatpush1.bf16.msra.mxu0 0
    %724 = vmatprep.subr.bf16.mxu0 0
    %725 = vmatpush1.bf16.msra.mxu0 0
    %726 = vmatprep.subr.bf16.mxu0 0
    %727 = vmatpush1.bf16.msra.mxu0 0
    %728 = vmatprep.subr.bf16.mxu0 0
    %729 = vmatpush1.bf16.msra.mxu0 0
    %730 = vmatprep.subr.bf16.mxu0 0
    %731 = vmatpush1.bf16.msra.mxu0 0
    %732 = vmatprep.subr.bf16.mxu0 0
    %733 = vmatpush1.bf16.msra.mxu0 0
    %734 = vmatprep.subr.bf16.mxu0 0
    %735 = vmatpush1.bf16.msra.mxu0 0
    %736 = vmatprep.subr.bf16.mxu0 0
    %737 = vmatpush1.bf16.msra.mxu0 0
    %738 = vmatprep.subr.bf16.mxu0 0
    %739 = vmatpush1.bf16.msra.mxu0 0
    %740 = vmatprep.mubr.bf16.mxu0 0
    %741 = vmatmul.mubr.bf16.gmra.mrb[0].mxu0 %v706
    %v742 = vpop.f32.mrb[0].mxu0
    %v743 = vadd.f32 0.0, %v742
    %v744 = vpop.f32.mrb[0].mxu0
    %v745 = vpop.f32.mrb[0].mxu0
    %v746 = vpop.f32.mrb[0].mxu0
    %747 = vdwg.mxu0
    %v748 = vadd.f32 %v696, %v743
    %v749 = vld [vmem:[%s3 + $0x38] sm:$0xf]
    %v750 = vld [vmem:[%s3 + $0x3c] sm:$0xf]
    %v752 = vrot.slane %v375, 4
    %v755 = vunpack.c.l.b16 %v749
    %v756 = vunpack.c.l.b16 %v750
    %v757 = vpack.c.b16 %v756, %v755
    %v760 = vsel %vm392, %v752, 0
    %762 = vmatprep.subr.bf16.mxu0 0
    %763 = vmatpush1.bf16.msra.mxu0 %v757
    %764 = vmatprep.subr.bf16.mxu0 0
    %765 = vmatpush1.bf16.msra.mxu0 0
    %766 = vmatprep.subr.bf16.mxu0 0
    %767 = vmatpush1.bf16.msra.mxu0 0
    %768 = vmatprep.subr.bf16.mxu0 0
    %769 = vmatpush1.bf16.msra.mxu0 0
    %770 = vmatprep.subr.bf16.mxu0 0
    %771 = vmatpush1.bf16.msra.mxu0 0
    %772 = vmatprep.subr.bf16.mxu0 0
    %773 = vmatpush1.bf16.msra.mxu0 0
    %774 = vmatprep.subr.bf16.mxu0 0
    %775 = vmatpush1.bf16.msra.mxu0 0
    %776 = vmatprep.subr.bf16.mxu0 0
    %777 = vmatpush1.bf16.msra.mxu0 0
    %778 = vmatprep.subr.bf16.mxu0 0
    %779 = vmatpush1.bf16.msra.mxu0 0
    %780 = vmatprep.subr.bf16.mxu0 0
    %781 = vmatpush1.bf16.msra.mxu0 0
    %782 = vmatprep.subr.bf16.mxu0 0
    %783 = vmatpush1.bf16.msra.mxu0 0
    %784 = vmatprep.subr.bf16.mxu0 0
    %785 = vmatpush1.bf16.msra.mxu0 0
    %786 = vmatprep.subr.bf16.mxu0 0
    %787 = vmatpush1.bf16.msra.mxu0 0
    %788 = vmatprep.subr.bf16.mxu0 0
    %789 = vmatpush1.bf16.msra.mxu0 0
    %790 = vmatprep.subr.bf16.mxu0 0
    %791 = vmatpush1.bf16.msra.mxu0 0
    %792 = vmatprep.subr.bf16.mxu0 0
    %793 = vmatpush1.bf16.msra.mxu0 0
    %794 = vmatprep.mubr.bf16.mxu0 0
    %795 = vmatmul.mubr.bf16.gmra.mrb[0].mxu0 %v760
    %v796 = vpop.f32.mrb[0].mxu0
    %v797 = vadd.f32 0.0, %v796
    %v798 = vpop.f32.mrb[0].mxu0
    %v799 = vpop.f32.mrb[0].mxu0
    %v800 = vpop.f32.mrb[0].mxu0
    %801 = vdwg.mxu0
    %v802 = vadd.f32 %v748, %v797
    %v803 = vld [vmem:[%s3 + $0x40] sm:$0xf]
    %v804 = vld [vmem:[%s3 + $0x44] sm:$0xf]
    %v807 = vunpack.c.l.b16 %v803
    %v808 = vunpack.c.l.b16 %v804
    %v809 = vpack.c.b16 %v808, %v807
    %v812 = vsel %vm392, %v376, 0
    %814 = vmatprep.subr.bf16.mxu0 0
    %815 = vmatpush1.bf16.msra.mxu0 %v809
    %816 = vmatprep.subr.bf16.mxu0 0
    %817 = vmatpush1.bf16.msra.mxu0 0
    %818 = vmatprep.subr.bf16.mxu0 0
    %819 = vmatpush1.bf16.msra.mxu0 0
    %820 = vmatprep.subr.bf16.mxu0 0
    %821 = vmatpush1.bf16.msra.mxu0 0
    %822 = vmatprep.subr.bf16.mxu0 0
    %823 = vmatpush1.bf16.msra.mxu0 0
    %824 = vmatprep.subr.bf16.mxu0 0
    %825 = vmatpush1.bf16.msra.mxu0 0
    %826 = vmatprep.subr.bf16.mxu0 0
    %827 = vmatpush1.bf16.msra.mxu0 0
    %828 = vmatprep.subr.bf16.mxu0 0
    %829 = vmatpush1.bf16.msra.mxu0 0
    %830 = vmatprep.subr.bf16.mxu0 0
    %831 = vmatpush1.bf16.msra.mxu0 0
    %832 = vmatprep.subr.bf16.mxu0 0
    %833 = vmatpush1.bf16.msra.mxu0 0
    %834 = vmatprep.subr.bf16.mxu0 0
    %835 = vmatpush1.bf16.msra.mxu0 0
    %836 = vmatprep.subr.bf16.mxu0 0
    %837 = vmatpush1.bf16.msra.mxu0 0
    %838 = vmatprep.subr.bf16.mxu0 0
    %839 = vmatpush1.bf16.msra.mxu0 0
    %840 = vmatprep.subr.bf16.mxu0 0
    %841 = vmatpush1.bf16.msra.mxu0 0
    %842 = vmatprep.subr.bf16.mxu0 0
    %843 = vmatpush1.bf16.msra.mxu0 0
    %844 = vmatprep.subr.bf16.mxu0 0
    %845 = vmatpush1.bf16.msra.mxu0 0
    %846 = vmatprep.mubr.bf16.mxu0 0
    %847 = vmatmul.mubr.bf16.gmra.mrb[0].mxu0 %v812
    %v848 = vpop.f32.mrb[0].mxu0
    %v849 = vadd.f32 0.0, %v848
    %v850 = vpop.f32.mrb[0].mxu0
    %v851 = vpop.f32.mrb[0].mxu0
    %v852 = vpop.f32.mrb[0].mxu0
    %853 = vdwg.mxu0
    %v854 = vadd.f32 %v802, %v849
    %v855 = vld [vmem:[%s3 + $0x48] sm:$0xf]
    %v856 = vld [vmem:[%s3 + $0x4c] sm:$0xf]
    %v858 = vrot.slane %v376, 4
    %v861 = vunpack.c.l.b16 %v855
    %v862 = vunpack.c.l.b16 %v856
    %v863 = vpack.c.b16 %v862, %v861
    %v866 = vsel %vm392, %v858, 0
    %868 = vmatprep.subr.bf16.mxu0 0
    %869 = vmatpush1.bf16.msra.mxu0 %v863
    %870 = vmatprep.subr.bf16.mxu0 0
    %871 = vmatpush1.bf16.msra.mxu0 0
    %872 = vmatprep.subr.bf16.mxu0 0
    %873 = vmatpush1.bf16.msra.mxu0 0
    %874 = vmatprep.subr.bf16.mxu0 0
    %875 = vmatpush1.bf16.msra.mxu0 0
    %876 = vmatprep.subr.bf16.mxu0 0
    %877 = vmatpush1.bf16.msra.mxu0 0
    %878 = vmatprep.subr.bf16.mxu0 0
    %879 = vmatpush1.bf16.msra.mxu0 0
    %880 = vmatprep.subr.bf16.mxu0 0
    %881 = vmatpush1.bf16.msra.mxu0 0
    %882 = vmatprep.subr.bf16.mxu0 0
    %883 = vmatpush1.bf16.msra.mxu0 0
    %884 = vmatprep.subr.bf16.mxu0 0
    %885 = vmatpush1.bf16.msra.mxu0 0
    %886 = vmatprep.subr.bf16.mxu0 0
    %887 = vmatpush1.bf16.msra.mxu0 0
    %888 = vmatprep.subr.bf16.mxu0 0
    %889 = vmatpush1.bf16.msra.mxu0 0
    %890 = vmatprep.subr.bf16.mxu0 0
    %891 = vmatpush1.bf16.msra.mxu0 0
    %892 = vmatprep.subr.bf16.mxu0 0
    %893 = vmatpush1.bf16.msra.mxu0 0
    %894 = vmatprep.subr.bf16.mxu0 0
    %895 = vmatpush1.bf16.msra.mxu0 0
    %896 = vmatprep.subr.bf16.mxu0 0
    %897 = vmatpush1.bf16.msra.mxu0 0
    %898 = vmatprep.subr.bf16.mxu0 0
    %899 = vmatpush1.bf16.msra.mxu0 0
    %900 = vmatprep.mubr.bf16.mxu0 0
    %901 = vmatmul.mubr.bf16.gmra.mrb[0].mxu0 %v866
    %v902 = vpop.f32.mrb[0].mxu0
    %v903 = vadd.f32 0.0, %v902
    %v904 = vpop.f32.mrb[0].mxu0
    %v905 = vpop.f32.mrb[0].mxu0
    %v906 = vpop.f32.mrb[0].mxu0
    %907 = vdwg.mxu0
    %v908 = vadd.f32 %v854, %v903
    %v909 = vld [vmem:[%s3 + $0x50] sm:$0xf]
    %v910 = vld [vmem:[%s3 + $0x54] sm:$0xf]
    %v913 = vunpack.c.l.b16 %v909
    %v914 = vunpack.c.l.b16 %v910
    %v915 = vpack.c.b16 %v914, %v913
    %v918 = vsel %vm392, %v377, 0
    %920 = vmatprep.subr.bf16.mxu0 0
    %921 = vmatpush1.bf16.msra.mxu0 %v915
    %922 = vmatprep.subr.bf16.mxu0 0
    %923 = vmatpush1.bf16.msra.mxu0 0
    %924 = vmatprep.subr.bf16.mxu0 0
    %925 = vmatpush1.bf16.msra.mxu0 0
    %926 = vmatprep.subr.bf16.mxu0 0
    %927 = vmatpush1.bf16.msra.mxu0 0
    %928 = vmatprep.subr.bf16.mxu0 0
    %929 = vmatpush1.bf16.msra.mxu0 0
    %930 = vmatprep.subr.bf16.mxu0 0
    %931 = vmatpush1.bf16.msra.mxu0 0
    %932 = vmatprep.subr.bf16.mxu0 0
    %933 = vmatpush1.bf16.msra.mxu0 0
    %934 = vmatprep.subr.bf16.mxu0 0
    %935 = vmatpush1.bf16.msra.mxu0 0
    %936 = vmatprep.subr.bf16.mxu0 0
    %937 = vmatpush1.bf16.msra.mxu0 0
    %938 = vmatprep.subr.bf16.mxu0 0
    %939 = vmatpush1.bf16.msra.mxu0 0
    %940 = vmatprep.subr.bf16.mxu0 0
    %941 = vmatpush1.bf16.msra.mxu0 0
    %942 = vmatprep.subr.bf16.mxu0 0
    %943 = vmatpush1.bf16.msra.mxu0 0
    %944 = vmatprep.subr.bf16.mxu0 0
    %945 = vmatpush1.bf16.msra.mxu0 0
    %946 = vmatprep.subr.bf16.mxu0 0
    %947 = vmatpush1.bf16.msra.mxu0 0
    %948 = vmatprep.subr.bf16.mxu0 0
    %949 = vmatpush1.bf16.msra.mxu0 0
    %950 = vmatprep.subr.bf16.mxu0 0
    %951 = vmatpush1.bf16.msra.mxu0 0
    %952 = vmatprep.mubr.bf16.mxu0 0
    %953 = vmatmul.mubr.bf16.gmra.mrb[0].mxu0 %v918
    %v954 = vpop.f32.mrb[0].mxu0
    %v955 = vadd.f32 0.0, %v954
    %v956 = vpop.f32.mrb[0].mxu0
    %v957 = vpop.f32.mrb[0].mxu0
    %v958 = vpop.f32.mrb[0].mxu0
    %959 = vdwg.mxu0
    %v960 = vadd.f32 %v908, %v955
    %v961 = vld [vmem:[%s3 + $0x58] sm:$0xf]
    %v962 = vld [vmem:[%s3 + $0x5c] sm:$0xf]
    %v964 = vrot.slane %v377, 4
    %v967 = vunpack.c.l.b16 %v961
    %v968 = vunpack.c.l.b16 %v962
    %v969 = vpack.c.b16 %v968, %v967
    %v972 = vsel %vm392, %v964, 0
    %974 = vmatprep.subr.bf16.mxu0 0
    %975 = vmatpush1.bf16.msra.mxu0 %v969
    %976 = vmatprep.subr.bf16.mxu0 0
    %977 = vmatpush1.bf16.msra.mxu0 0
    %978 = vmatprep.subr.bf16.mxu0 0
    %979 = vmatpush1.bf16.msra.mxu0 0
    %980 = vmatprep.subr.bf16.mxu0 0
    %981 = vmatpush1.bf16.msra.mxu0 0
    %982 = vmatprep.subr.bf16.mxu0 0
    %983 = vmatpush1.bf16.msra.mxu0 0
    %984 = vmatprep.subr.bf16.mxu0 0
    %985 = vmatpush1.bf16.msra.mxu0 0
    %986 = vmatprep.subr.bf16.mxu0 0
    %987 = vmatpush1.bf16.msra.mxu0 0
    %988 = vmatprep.subr.bf16.mxu0 0
    %989 = vmatpush1.bf16.msra.mxu0 0
    %990 = vmatprep.subr.bf16.mxu0 0
    %991 = vmatpush1.bf16.msra.mxu0 0
    %992 = vmatprep.subr.bf16.mxu0 0
    %993 = vmatpush1.bf16.msra.mxu0 0
    %994 = vmatprep.subr.bf16.mxu0 0
    %995 = vmatpush1.bf16.msra.mxu0 0
    %996 = vmatprep.subr.bf16.mxu0 0
    %997 = vmatpush1.bf16.msra.mxu0 0
    %998 = vmatprep.subr.bf16.mxu0 0
    %999 = vmatpush1.bf16.msra.mxu0 0
    %1000 = vmatprep.subr.bf16.mxu0 0
    %1001 = vmatpush1.bf16.msra.mxu0 0
    %1002 = vmatprep.subr.bf16.mxu0 0
    %1003 = vmatpush1.bf16.msra.mxu0 0
    %1004 = vmatprep.subr.bf16.mxu0 0
    %1005 = vmatpush1.bf16.msra.mxu0 0
    %1006 = vmatprep.mubr.bf16.mxu0 0
    %1007 = vmatmul.mubr.bf16.gmra.mrb[0].mxu0 %v972
    %v1008 = vpop.f32.mrb[0].mxu0
    %v1009 = vadd.f32 0.0, %v1008
    %v1010 = vpop.f32.mrb[0].mxu0
    %v1011 = vpop.f32.mrb[0].mxu0
    %v1012 = vpop.f32.mrb[0].mxu0
    %1013 = vdwg.mxu0
    %v1014 = vadd.f32 %v960, %v1009
    %v1015 = vld [vmem:[%s3 + $0x60] sm:$0xf]
    %v1016 = vld [vmem:[%s3 + $0x64] sm:$0xf]
    %v1019 = vunpack.c.l.b16 %v1015
    %v1020 = vunpack.c.l.b16 %v1016
    %v1021 = vpack.c.b16 %v1020, %v1019
    %v1024 = vsel %vm392, %v378, 0
    %1026 = vmatprep.subr.bf16.mxu0 0
    %1027 = vmatpush1.bf16.msra.mxu0 %v1021
    %1028 = vmatprep.subr.bf16.mxu0 0
    %1029 = vmatpush1.bf16.msra.mxu0 0
    %1030 = vmatprep.subr.bf16.mxu0 0
    %1031 = vmatpush1.bf16.msra.mxu0 0
    %1032 = vmatprep.subr.bf16.mxu0 0
    %1033 = vmatpush1.bf16.msra.mxu0 0
    %1034 = vmatprep.subr.bf16.mxu0 0
    %1035 = vmatpush1.bf16.msra.mxu0 0
    %1036 = vmatprep.subr.bf16.mxu0 0
    %1037 = vmatpush1.bf16.msra.mxu0 0
    %1038 = vmatprep.subr.bf16.mxu0 0
    %1039 = vmatpush1.bf16.msra.mxu0 0
    %1040 = vmatprep.subr.bf16.mxu0 0
    %1041 = vmatpush1.bf16.msra.mxu0 0
    %1042 = vmatprep.subr.bf16.mxu0 0
    %1043 = vmatpush1.bf16.msra.mxu0 0
    %1044 = vmatprep.subr.bf16.mxu0 0
    %1045 = vmatpush1.bf16.msra.mxu0 0
    %1046 = vmatprep.subr.bf16.mxu0 0
    %1047 = vmatpush1.bf16.msra.mxu0 0
    %1048 = vmatprep.subr.bf16.mxu0 0
    %1049 = vmatpush1.bf16.msra.mxu0 0
    %1050 = vmatprep.subr.bf16.mxu0 0
    %1051 = vmatpush1.bf16.msra.mxu0 0
    %1052 = vmatprep.subr.bf16.mxu0 0
    %1053 = vmatpush1.bf16.msra.mxu0 0
    %1054 = vmatprep.subr.bf16.mxu0 0
    %1055 = vmatpush1.bf16.msra.mxu0 0
    %1056 = vmatprep.subr.bf16.mxu0 0
    %1057 = vmatpush1.bf16.msra.mxu0 0
    %1058 = vmatprep.mubr.bf16.mxu0 0
    %1059 = vmatmul.mubr.bf16.gmra.mrb[0].mxu0 %v1024
    %v1060 = vpop.f32.mrb[0].mxu0
    %v1061 = vadd.f32 0.0, %v1060
    %v1062 = vpop.f32.mrb[0].mxu0
    %v1063 = vpop.f32.mrb[0].mxu0
    %v1064 = vpop.f32.mrb[0].mxu0
    %1065 = vdwg.mxu0
    %v1066 = vadd.f32 %v1014, %v1061
    %v1067 = vld [vmem:[%s3 + $0x68] sm:$0xf]
    %v1068 = vld [vmem:[%s3 + $0x6c] sm:$0xf]
    %v1070 = vrot.slane %v378, 4
    %v1073 = vunpack.c.l.b16 %v1067
    %v1074 = vunpack.c.l.b16 %v1068
    %v1075 = vpack.c.b16 %v1074, %v1073
    %v1078 = vsel %vm392, %v1070, 0
    %1080 = vmatprep.subr.bf16.mxu0 0
    %1081 = vmatpush1.bf16.msra.mxu0 %v1075
    %1082 = vmatprep.subr.bf16.mxu0 0
    %1083 = vmatpush1.bf16.msra.mxu0 0
    %1084 = vmatprep.subr.bf16.mxu0 0
    %1085 = vmatpush1.bf16.msra.mxu0 0
    %1086 = vmatprep.subr.bf16.mxu0 0
    %1087 = vmatpush1.bf16.msra.mxu0 0
    %1088 = vmatprep.subr.bf16.mxu0 0
    %1089 = vmatpush1.bf16.msra.mxu0 0
    %1090 = vmatprep.subr.bf16.mxu0 0
    %1091 = vmatpush1.bf16.msra.mxu0 0
    %1092 = vmatprep.subr.bf16.mxu0 0
    %1093 = vmatpush1.bf16.msra.mxu0 0
    %1094 = vmatprep.subr.bf16.mxu0 0
    %1095 = vmatpush1.bf16.msra.mxu0 0
    %1096 = vmatprep.subr.bf16.mxu0 0
    %1097 = vmatpush1.bf16.msra.mxu0 0
    %1098 = vmatprep.subr.bf16.mxu0 0
    %1099 = vmatpush1.bf16.msra.mxu0 0
    %1100 = vmatprep.subr.bf16.mxu0 0
    %1101 = vmatpush1.bf16.msra.mxu0 0
    %1102 = vmatprep.subr.bf16.mxu0 0
    %1103 = vmatpush1.bf16.msra.mxu0 0
    %1104 = vmatprep.subr.bf16.mxu0 0
    %1105 = vmatpush1.bf16.msra.mxu0 0
    %1106 = vmatprep.subr.bf16.mxu0 0
    %1107 = vmatpush1.bf16.msra.mxu0 0
    %1108 = vmatprep.subr.bf16.mxu0 0
    %1109 = vmatpush1.bf16.msra.mxu0 0
    %1110 = vmatprep.subr.bf16.mxu0 0
    %1111 = vmatpush1.bf16.msra.mxu0 0
    %1112 = vmatprep.mubr.bf16.mxu0 0
    %1113 = vmatmul.mubr.bf16.gmra.mrb[0].mxu0 %v1078
    %v1114 = vpop.f32.mrb[0].mxu0
    %v1115 = vadd.f32 0.0, %v1114
    %v1116 = vpop.f32.mrb[0].mxu0
    %v1117 = vpop.f32.mrb[0].mxu0
    %v1118 = vpop.f32.mrb[0].mxu0
    %1119 = vdwg.mxu0
    %v1120 = vadd.f32 %v1066, %v1115
    %v1121 = vld [vmem:[%s3 + $0x70] sm:$0xf]
    %v1122 = vld [vmem:[%s3 + $0x74] sm:$0xf]
    %v1125 = vunpack.c.l.b16 %v1121
    %v1126 = vunpack.c.l.b16 %v1122
    %v1127 = vpack.c.b16 %v1126, %v1125
    %v1130 = vsel %vm392, %v379, 0
    %1132 = vmatprep.subr.bf16.mxu0 0
    %1133 = vmatpush1.bf16.msra.mxu0 %v1127
    %1134 = vmatprep.subr.bf16.mxu0 0
    %1135 = vmatpush1.bf16.msra.mxu0 0
    %1136 = vmatprep.subr.bf16.mxu0 0
    %1137 = vmatpush1.bf16.msra.mxu0 0
    %1138 = vmatprep.subr.bf16.mxu0 0
    %1139 = vmatpush1.bf16.msra.mxu0 0
    %1140 = vmatprep.subr.bf16.mxu0 0
    %1141 = vmatpush1.bf16.msra.mxu0 0
    %1142 = vmatprep.subr.bf16.mxu0 0
    %1143 = vmatpush1.bf16.msra.mxu0 0
    %1144 = vmatprep.subr.bf16.mxu0 0
    %1145 = vmatpush1.bf16.msra.mxu0 0
    %1146 = vmatprep.subr.bf16.mxu0 0
    %1147 = vmatpush1.bf16.msra.mxu0 0
    %1148 = vmatprep.subr.bf16.mxu0 0
    %1149 = vmatpush1.bf16.msra.mxu0 0
    %1150 = vmatprep.subr.bf16.mxu0 0
    %1151 = vmatpush1.bf16.msra.mxu0 0
    %1152 = vmatprep.subr.bf16.mxu0 0
    %1153 = vmatpush1.bf16.msra.mxu0 0
    %1154 = vmatprep.subr.bf16.mxu0 0
    %1155 = vmatpush1.bf16.msra.mxu0 0
    %1156 = vmatprep.subr.bf16.mxu0 0
    %1157 = vmatpush1.bf16.msra.mxu0 0
    %1158 = vmatprep.subr.bf16.mxu0 0
    %1159 = vmatpush1.bf16.msra.mxu0 0
    %1160 = vmatprep.subr.bf16.mxu0 0
    %1161 = vmatpush1.bf16.msra.mxu0 0
    %1162 = vmatprep.subr.bf16.mxu0 0
    %1163 = vmatpush1.bf16.msra.mxu0 0
    %1164 = vmatprep.mubr.bf16.mxu0 0
    %1165 = vmatmul.mubr.bf16.gmra.mrb[0].mxu0 %v1130
    %v1166 = vpop.f32.mrb[0].mxu0
    %v1167 = vadd.f32 0.0, %v1166
    %v1168 = vpop.f32.mrb[0].mxu0
    %v1169 = vpop.f32.mrb[0].mxu0
    %v1170 = vpop.f32.mrb[0].mxu0
    %1171 = vdwg.mxu0
    %v1172 = vadd.f32 %v1120, %v1167
    %v1173 = vld [vmem:[%s3 + $0x78] sm:$0xf]
    %v1174 = vld [vmem:[%s3 + $0x7c] sm:$0xf]
    %v1176 = vrot.slane %v379, 4
    %v1179 = vunpack.c.l.b16 %v1173
    %v1180 = vunpack.c.l.b16 %v1174
    %v1181 = vpack.c.b16 %v1180, %v1179
    %v1184 = vsel %vm392, %v1176, 0
    %1186 = vmatprep.subr.bf16.mxu0 0
    %1187 = vmatpush1.bf16.msra.mxu0 %v1181
    %1188 = vmatprep.subr.bf16.mxu0 0
    %1189 = vmatpush1.bf16.msra.mxu0 0
    %1190 = vmatprep.subr.bf16.mxu0 0
    %1191 = vmatpush1.bf16.msra.mxu0 0
    %1192 = vmatprep.subr.bf16.mxu0 0
    %1193 = vmatpush1.bf16.msra.mxu0 0
    %1194 = vmatprep.subr.bf16.mxu0 0
    %1195 = vmatpush1.bf16.msra.mxu0 0
    %1196 = vmatprep.subr.bf16.mxu0 0
    %1197 = vmatpush1.bf16.msra.mxu0 0
    %1198 = vmatprep.subr.bf16.mxu0 0
    %1199 = vmatpush1.bf16.msra.mxu0 0
    %1200 = vmatprep.subr.bf16.mxu0 0
    %1201 = vmatpush1.bf16.msra.mxu0 0
    %1202 = vmatprep.subr.bf16.mxu0 0
    %1203 = vmatpush1.bf16.msra.mxu0 0
    %1204 = vmatprep.subr.bf16.mxu0 0
    %1205 = vmatpush1.bf16.msra.mxu0 0
    %1206 = vmatprep.subr.bf16.mxu0 0
    %1207 = vmatpush1.bf16.msra.mxu0 0
    %1208 = vmatprep.subr.bf16.mxu0 0
    %1209 = vmatpush1.bf16.msra.mxu0 0
    %1210 = vmatprep.subr.bf16.mxu0 0
    %1211 = vmatpush1.bf16.msra.mxu0 0
    %1212 = vmatprep.subr.bf16.mxu0 0
    %1213 = vmatpush1.bf16.msra.mxu0 0
    %1214 = vmatprep.subr.bf16.mxu0 0
    %1215 = vmatpush1.bf16.msra.mxu0 0
    %1216 = vmatprep.subr.bf16.mxu0 0
    %1217 = vmatpush1.bf16.msra.mxu0 0
    %1218 = vmatprep.mubr.bf16.mxu0 0
    %1219 = vmatmul.mubr.bf16.gmra.mrb[0].mxu0 %v1184
    %v1220 = vpop.f32.mrb[0].mxu0
    %v1221 = vadd.f32 0.0, %v1220
    %v1222 = vpop.f32.mrb[0].mxu0
    %v1223 = vpop.f32.mrb[0].mxu0
    %v1224 = vpop.f32.mrb[0].mxu0
    %1225 = vdwg.mxu0
    %v1226 = vadd.f32 %v1172, %v1221
    %v1227 = vld [vmem:[%s4] sm:$0x1]
    %v1229 = vlaneseq
    %v1230 = vshrl.u32 %v1229, 7
    %v1231 = vsub.s32 0, %v1230
    %v1232 = vrot.slane %v1227, %v1231
    %v1234 = vadd.f32 %v1226, %v1232
    %v1235 = vmax.f32 %v1234, 0.0
    %v1236 = vld [vmem:[%s5] sm:$0xff]
    %v1237 = vld [vmem:[%s5 + $0x8] sm:$0xff]
    %v1238 = vld [vmem:[%s5 + $0x10] sm:$0xff]
    %v1239 = vld [vmem:[%s5 + $0x18] sm:$0xff]
    %v1240 = vld [vmem:[%s5 + $0x20] sm:$0xff]
    %v1241 = vld [vmem:[%s5 + $0x28] sm:$0xff]
    %v1242 = vld [vmem:[%s5 + $0x30] sm:$0xff]
    %v1243 = vld [vmem:[%s5 + $0x38] sm:$0xff]
    %v1245 = vrot.slane %v1235, 2
    %vm1246 = vcmask 261120
    %v1247 = vsel %vm1246, %v1245, 0
    %1249 = vmatprep.subr.mxu0 0.0
    %1250 = vmatpush1.msra.mxu0 %v1240
    %1251 = vmatprep.subr.mxu0 0.0
    %1252 = vmatpush1.msra.mxu0 %v1241
    %1253 = vmatprep.subr.mxu0 0.0
    %1254 = vmatpush1.msra.mxu0 %v1242
    %1255 = vmatprep.subr.mxu0 0.0
    %1256 = vmatpush1.msra.mxu0 %v1243
    %1257 = vmatprep.subr.mxu0 0.0
    %1258 = vmatpush1.msra.mxu0 0.0
    %1259 = vmatprep.subr.mxu0 0.0
    %1260 = vmatpush1.msra.mxu0 0.0
    %1261 = vmatprep.subr.mxu0 0.0
    %1262 = vmatpush1.msra.mxu0 0.0
    %1263 = vmatprep.subr.mxu0 0.0
    %1264 = vmatpush1.msra.mxu0 0.0
    %1265 = vmatprep.subr.mxu0 0.0
    %1266 = vmatpush1.msra.mxu0 0.0
    %1267 = vmatprep.subr.mxu0 0.0
    %1268 = vmatpush1.msra.mxu0 0.0
    %1269 = vmatprep.subr.mxu0 0.0
    %1270 = vmatpush1.msra.mxu0 0.0
    %1271 = vmatprep.subr.mxu0 0.0
    %1272 = vmatpush1.msra.mxu0 0.0
    %1273 = vmatprep.subr.mxu0 0.0
    %1274 = vmatpush1.msra.mxu0 0.0
    %1275 = vmatprep.subr.mxu0 0.0
    %1276 = vmatpush1.msra.mxu0 0.0
    %1277 = vmatprep.subr.mxu0 0.0
    %1278 = vmatpush1.msra.mxu0 0.0
    %1279 = vmatprep.subr.mxu0 0.0
    %1280 = vmatpush1.msra.mxu0 0.0
    %1281 = vmatprep.subr.mxu0 0.0
    %1282 = vmatpush1.msra.mxu0 0.0
    %1283 = vmatprep.subr.mxu0 0.0
    %1284 = vmatpush1.msra.mxu0 0.0
    %1285 = vmatprep.subr.mxu0 0.0
    %1286 = vmatpush1.msra.mxu0 0.0
    %1287 = vmatprep.subr.mxu0 0.0
    %1288 = vmatpush1.msra.mxu0 0.0
    %1289 = vmatprep.subr.mxu0 0.0
    %1290 = vmatpush1.msra.mxu0 0.0
    %1291 = vmatprep.subr.mxu0 0.0
    %1292 = vmatpush1.msra.mxu0 0.0
    %1293 = vmatprep.subr.mxu0 0.0
    %1294 = vmatpush1.msra.mxu0 0.0
    %1295 = vmatprep.subr.mxu0 0.0
    %1296 = vmatpush1.msra.mxu0 0.0
    %1297 = vmatprep.subr.mxu0 0.0
    %1298 = vmatpush1.msra.mxu0 0.0
    %1299 = vmatprep.subr.mxu0 0.0
    %1300 = vmatpush1.msra.mxu0 0.0
    %1301 = vmatprep.subr.mxu0 0.0
    %1302 = vmatpush1.msra.mxu0 0.0
    %1303 = vmatprep.subr.mxu0 0.0
    %1304 = vmatpush1.msra.mxu0 0.0
    %1305 = vmatprep.subr.mxu0 0.0
    %1306 = vmatpush1.msra.mxu0 0.0
    %1307 = vmatprep.subr.mxu0 0.0
    %1308 = vmatpush1.msra.mxu0 0.0
    %1309 = vmatprep.subr.mxu0 0.0
    %1310 = vmatpush1.msra.mxu0 0.0
    %1311 = vmatprep.subr.mxu0 0.0
    %1312 = vmatpush1.msra.mxu0 0.0
    %1313 = vmatprep.mubr.f32.mxu0 0.0
    %1314 = vmatmul.mubr.f32.gmra.mrb[0].mxu0 %v1247
    %v1315 = vpop.f32.mrb[0].mxu0
    %v1316 = vadd.f32 0.0, %v1315
    %v1317 = vpop.f32.mrb[0].mxu0
    %1318 = vdwg.mxu0
    %v1319 = vsel %vm1246, %v1235, 0
    %1321 = vmatprep.subr.mxu0 0.0
    %1322 = vmatpush1.msra.mxu0 %v1236
    %1323 = vmatprep.subr.mxu0 0.0
    %1324 = vmatpush1.msra.mxu0 %v1237
    %1325 = vmatprep.subr.mxu0 0.0
    %1326 = vmatpush1.msra.mxu0 %v1238
    %1327 = vmatprep.subr.mxu0 0.0
    %1328 = vmatpush1.msra.mxu0 %v1239
    %1329 = vmatprep.subr.mxu0 0.0
    %1330 = vmatpush1.msra.mxu0 0.0
    %1331 = vmatprep.subr.mxu0 0.0
    %1332 = vmatpush1.msra.mxu0 0.0
    %1333 = vmatprep.subr.mxu0 0.0
    %1334 = vmatpush1.msra.mxu0 0.0
    %1335 = vmatprep.subr.mxu0 0.0
    %1336 = vmatpush1.msra.mxu0 0.0
    %1337 = vmatprep.subr.mxu0 0.0
    %1338 = vmatpush1.msra.mxu0 0.0
    %1339 = vmatprep.subr.mxu0 0.0
    %1340 = vmatpush1.msra.mxu0 0.0
    %1341 = vmatprep.subr.mxu0 0.0
    %1342 = vmatpush1.msra.mxu0 0.0
    %1343 = vmatprep.subr.mxu0 0.0
    %1344 = vmatpush1.msra.mxu0 0.0
    %1345 = vmatprep.subr.mxu0 0.0
    %1346 = vmatpush1.msra.mxu0 0.0
    %1347 = vmatprep.subr.mxu0 0.0
    %1348 = vmatpush1.msra.mxu0 0.0
    %1349 = vmatprep.subr.mxu0 0.0
    %1350 = vmatpush1.msra.mxu0 0.0
    %1351 = vmatprep.subr.mxu0 0.0
    %1352 = vmatpush1.msra.mxu0 0.0
    %1353 = vmatprep.subr.mxu0 0.0
    %1354 = vmatpush1.msra.mxu0 0.0
    %1355 = vmatprep.subr.mxu0 0.0
    %1356 = vmatpush1.msra.mxu0 0.0
    %1357 = vmatprep.subr.mxu0 0.0
    %1358 = vmatpush1.msra.mxu0 0.0
    %1359 = vmatprep.subr.mxu0 0.0
    %1360 = vmatpush1.msra.mxu0 0.0
    %1361 = vmatprep.subr.mxu0 0.0
    %1362 = vmatpush1.msra.mxu0 0.0
    %1363 = vmatprep.subr.mxu0 0.0
    %1364 = vmatpush1.msra.mxu0 0.0
    %1365 = vmatprep.subr.mxu0 0.0
    %1366 = vmatpush1.msra.mxu0 0.0
    %1367 = vmatprep.subr.mxu0 0.0
    %1368 = vmatpush1.msra.mxu0 0.0
    %1369 = vmatprep.subr.mxu0 0.0
    %1370 = vmatpush1.msra.mxu0 0.0
    %1371 = vmatprep.subr.mxu0 0.0
    %1372 = vmatpush1.msra.mxu0 0.0
    %1373 = vmatprep.subr.mxu0 0.0
    %1374 = vmatpush1.msra.mxu0 0.0
    %1375 = vmatprep.subr.mxu0 0.0
    %1376 = vmatpush1.msra.mxu0 0.0
    %1377 = vmatprep.subr.mxu0 0.0
    %1378 = vmatpush1.msra.mxu0 0.0
    %1379 = vmatprep.subr.mxu0 0.0
    %1380 = vmatpush1.msra.mxu0 0.0
    %1381 = vmatprep.subr.mxu0 0.0
    %1382 = vmatpush1.msra.mxu0 0.0
    %1383 = vmatprep.subr.mxu0 0.0
    %1384 = vmatpush1.msra.mxu0 0.0
    %1385 = vmatprep.mubr.f32.mxu0 0.0
    %1386 = vmatmul.mubr.f32.gmra.mrb[0].mxu0 %v1319
    %v1387 = vpop.f32.mrb[0].mxu0
    %v1388 = vadd.f32 %v1316, %v1387
    %v1389 = vpop.f32.mrb[0].mxu0
    %1390 = vdwg.mxu0
    %v1391 = vld [vmem:[%s5 + $0x40] sm:$0xff]
    %v1392 = vld [vmem:[%s5 + $0x48] sm:$0xff]
    %v1393 = vld [vmem:[%s5 + $0x50] sm:$0xff]
    %v1394 = vld [vmem:[%s5 + $0x58] sm:$0xff]
    %v1395 = vrot.slane %v1235, 4
    %v1396 = vsel %vm1246, %v1395, 0
    %1398 = vmatprep.subr.mxu0 0.0
    %1399 = vmatpush1.msra.mxu0 %v1391
    %1400 = vmatprep.subr.mxu0 0.0
    %1401 = vmatpush1.msra.mxu0 %v1392
    %1402 = vmatprep.subr.mxu0 0.0
    %1403 = vmatpush1.msra.mxu0 %v1393
    %1404 = vmatprep.subr.mxu0 0.0
    %1405 = vmatpush1.msra.mxu0 %v1394
    %1406 = vmatprep.subr.mxu0 0.0
    %1407 = vmatpush1.msra.mxu0 0.0
    %1408 = vmatprep.subr.mxu0 0.0
    %1409 = vmatpush1.msra.mxu0 0.0
    %1410 = vmatprep.subr.mxu0 0.0
    %1411 = vmatpush1.msra.mxu0 0.0
    %1412 = vmatprep.subr.mxu0 0.0
    %1413 = vmatpush1.msra.mxu0 0.0
    %1414 = vmatprep.subr.mxu0 0.0
    %1415 = vmatpush1.msra.mxu0 0.0
    %1416 = vmatprep.subr.mxu0 0.0
    %1417 = vmatpush1.msra.mxu0 0.0
    %1418 = vmatprep.subr.mxu0 0.0
    %1419 = vmatpush1.msra.mxu0 0.0
    %1420 = vmatprep.subr.mxu0 0.0
    %1421 = vmatpush1.msra.mxu0 0.0
    %1422 = vmatprep.subr.mxu0 0.0
    %1423 = vmatpush1.msra.mxu0 0.0
    %1424 = vmatprep.subr.mxu0 0.0
    %1425 = vmatpush1.msra.mxu0 0.0
    %1426 = vmatprep.subr.mxu0 0.0
    %1427 = vmatpush1.msra.mxu0 0.0
    %1428 = vmatprep.subr.mxu0 0.0
    %1429 = vmatpush1.msra.mxu0 0.0
    %1430 = vmatprep.subr.mxu0 0.0
    %1431 = vmatpush1.msra.mxu0 0.0
    %1432 = vmatprep.subr.mxu0 0.0
    %1433 = vmatpush1.msra.mxu0 0.0
    %1434 = vmatprep.subr.mxu0 0.0
    %1435 = vmatpush1.msra.mxu0 0.0
    %1436 = vmatprep.subr.mxu0 0.0
    %1437 = vmatpush1.msra.mxu0 0.0
    %1438 = vmatprep.subr.mxu0 0.0
    %1439 = vmatpush1.msra.mxu0 0.0
    %1440 = vmatprep.subr.mxu0 0.0
    %1441 = vmatpush1.msra.mxu0 0.0
    %1442 = vmatprep.subr.mxu0 0.0
    %1443 = vmatpush1.msra.mxu0 0.0
    %1444 = vmatprep.subr.mxu0 0.0
    %1445 = vmatpush1.msra.mxu0 0.0
    %1446 = vmatprep.subr.mxu0 0.0
    %1447 = vmatpush1.msra.mxu0 0.0
    %1448 = vmatprep.subr.mxu0 0.0
    %1449 = vmatpush1.msra.mxu0 0.0
    %1450 = vmatprep.subr.mxu0 0.0
    %1451 = vmatpush1.msra.mxu0 0.0
    %1452 = vmatprep.subr.mxu0 0.0
    %1453 = vmatpush1.msra.mxu0 0.0
    %1454 = vmatprep.subr.mxu0 0.0
    %1455 = vmatpush1.msra.mxu0 0.0
    %1456 = vmatprep.subr.mxu0 0.0
    %1457 = vmatpush1.msra.mxu0 0.0
    %1458 = vmatprep.subr.mxu0 0.0
    %1459 = vmatpush1.msra.mxu0 0.0
    %1460 = vmatprep.subr.mxu0 0.0
    %1461 = vmatpush1.msra.mxu0 0.0
    %1462 = vmatprep.mubr.f32.mxu0 0.0
    %1463 = vmatmul.mubr.f32.gmra.mrb[0].mxu0 %v1396
    %v1464 = vpop.f32.mrb[0].mxu0
    %v1465 = vadd.f32 0.0, %v1464
    %v1466 = vpop.f32.mrb[0].mxu0
    %1467 = vdwg.mxu0
    %v1468 = vadd.f32 %v1388, %v1465
    %v1469 = vld [vmem:[%s5 + $0x60] sm:$0xff]
    %v1470 = vld [vmem:[%s5 + $0x68] sm:$0xff]
    %v1471 = vld [vmem:[%s5 + $0x70] sm:$0xff]
    %v1472 = vld [vmem:[%s5 + $0x78] sm:$0xff]
    %v1473 = vrot.slane %v1235, 6
    %v1474 = vsel %vm1246, %v1473, 0
    %1476 = vmatprep.subr.mxu0 0.0
    %1477 = vmatpush1.msra.mxu0 %v1469
    %1478 = vmatprep.subr.mxu0 0.0
    %1479 = vmatpush1.msra.mxu0 %v1470
    %1480 = vmatprep.subr.mxu0 0.0
    %1481 = vmatpush1.msra.mxu0 %v1471
    %1482 = vmatprep.subr.mxu0 0.0
    %1483 = vmatpush1.msra.mxu0 %v1472
    %1484 = vmatprep.subr.mxu0 0.0
    %1485 = vmatpush1.msra.mxu0 0.0
    %1486 = vmatprep.subr.mxu0 0.0
    %1487 = vmatpush1.msra.mxu0 0.0
    %1488 = vmatprep.subr.mxu0 0.0
    %1489 = vmatpush1.msra.mxu0 0.0
    %1490 = vmatprep.subr.mxu0 0.0
    %1491 = vmatpush1.msra.mxu0 0.0
    %1492 = vmatprep.subr.mxu0 0.0
    %1493 = vmatpush1.msra.mxu0 0.0
    %1494 = vmatprep.subr.mxu0 0.0
    %1495 = vmatpush1.msra.mxu0 0.0
    %1496 = vmatprep.subr.mxu0 0.0
    %1497 = vmatpush1.msra.mxu0 0.0
    %1498 = vmatprep.subr.mxu0 0.0
    %1499 = vmatpush1.msra.mxu0 0.0
    %1500 = vmatprep.subr.mxu0 0.0
    %1501 = vmatpush1.msra.mxu0 0.0
    %1502 = vmatprep.subr.mxu0 0.0
    %1503 = vmatpush1.msra.mxu0 0.0
    %1504 = vmatprep.subr.mxu0 0.0
    %1505 = vmatpush1.msra.mxu0 0.0
    %1506 = vmatprep.subr.mxu0 0.0
    %1507 = vmatpush1.msra.mxu0 0.0
    %1508 = vmatprep.subr.mxu0 0.0
    %1509 = vmatpush1.msra.mxu0 0.0
    %1510 = vmatprep.subr.mxu0 0.0
    %1511 = vmatpush1.msra.mxu0 0.0
    %1512 = vmatprep.subr.mxu0 0.0
    %1513 = vmatpush1.msra.mxu0 0.0
    %1514 = vmatprep.subr.mxu0 0.0
    %1515 = vmatpush1.msra.mxu0 0.0
    %1516 = vmatprep.subr.mxu0 0.0
    %1517 = vmatpush1.msra.mxu0 0.0
    %1518 = vmatprep.subr.mxu0 0.0
    %1519 = vmatpush1.msra.mxu0 0.0
    %1520 = vmatprep.subr.mxu0 0.0
    %1521 = vmatpush1.msra.mxu0 0.0
    %1522 = vmatprep.subr.mxu0 0.0
    %1523 = vmatpush1.msra.mxu0 0.0
    %1524 = vmatprep.subr.mxu0 0.0
    %1525 = vmatpush1.msra.mxu0 0.0
    %1526 = vmatprep.subr.mxu0 0.0
    %1527 = vmatpush1.msra.mxu0 0.0
    %1528 = vmatprep.subr.mxu0 0.0
    %1529 = vmatpush1.msra.mxu0 0.0
    %1530 = vmatprep.subr.mxu0 0.0
    %1531 = vmatpush1.msra.mxu0 0.0
    %1532 = vmatprep.subr.mxu0 0.0
    %1533 = vmatpush1.msra.mxu0 0.0
    %1534 = vmatprep.subr.mxu0 0.0
    %1535 = vmatpush1.msra.mxu0 0.0
    %1536 = vmatprep.subr.mxu0 0.0
    %1537 = vmatpush1.msra.mxu0 0.0
    %1538 = vmatprep.subr.mxu0 0.0
    %1539 = vmatpush1.msra.mxu0 0.0
    %1540 = vmatprep.mubr.f32.mxu0 0.0
    %1541 = vmatmul.mubr.f32.gmra.mrb[0].mxu0 %v1474
    %v1542 = vpop.f32.mrb[0].mxu0
    %v1543 = vadd.f32 0.0, %v1542
    %v1544 = vpop.f32.mrb[0].mxu0
    %1545 = vdwg.mxu0
    %v1546 = vadd.f32 %v1468, %v1543
    %v1547 = vld [vmem:[%s6] sm:$0x1]
    %v1549 = vlaneseq
    %v1550 = vshrl.u32 %v1549, 7
    %v1551 = vsub.s32 0, %v1550
    %v1552 = vrot.slane %v1547, %v1551
    %v1554 = vadd.f32 %v1546, %v1552
    %vm1555 = vcmask 41984
    %1556 = vst.msk [vmem:[#allocation2] sm:$0x3] %vm1555, %v1554
    // Predicated region
    $region30: #{_forward_impl.1} parent=1 // pred_check
      _
    $region31: #{_forward_impl.1} parent=1 // pred_check_branch
      %1558 = sbr.rel (0) target = $region33
    $region32: #{_forward_impl.1} parent=1 // pred_region
      %s1560 = ssub.s32 32, 32
      %1561 = vsyncadd [#allocation3], %s1560
      %s1563 = sshll.u32 [#allocation2], 4
      %s1564 = int_to_ptr.vmem [resolvable:$true] %s1563
      %1566 = dma.vmem_to_hbm [thread:$0]  %s1564, 32, %s7, [#allocation3]
    $region33: #{_forward_impl.1} parent=1 // pred_fallthru
      _
    // Predicated region
    $region34: #{_forward_impl.1} parent=1 // pred_check
      _
    $region35: #{_forward_impl.1} parent=1 // pred_check_branch
      %1568 = sbr.rel (0) target = $region37
    $region36: #{_forward_impl.1} parent=1 // pred_region
      %1569 = dma.done [#allocation3], 32
    $region37: #{_forward_impl.1} parent=1 // pred_fallthru
      _
    %1570 = vsyncpa [#allocation3], 1

</llo_original>
